<compile_context>
chip_gen: v6e
topology: v6e:2x2x1
jax: 0.10.0
libtpu: 0.0.40
codegen_flags: <defaults>
</compile_context>

<pallas_src>
import functools

import jax
import jax.numpy as jnp
from jax import lax
from jax.experimental import pallas as pl
from jax.experimental.pallas import tpu as pltpu
import numpy as np


def _rcab_kernel(x_ref, w1_ref, b1_ref, w2_ref, b2_ref,
                 wd_ref, bd_ref, wu_ref, bu_ref, o_ref,
                 *, H, W, C, res_scale, matmul_dtype):
    WC = W * C
    x = x_ref[0]                                      # (H, W*C) f32, lane-dense

    zero_row = jnp.zeros((1, WC), matmul_dtype)

    def conv3x3(a, w_ref, b_ref):
        # a: (H, W*C). w_ref: (3, W*C, W*C) block-banded weights (ky-major);
        # the banded structure already encodes the kx taps and W zero-padding.
        am = a.astype(matmul_dtype)
        up = jnp.concatenate([zero_row, am[:H - 1, :]], axis=0)   # row i -> a[i-1]
        dn = jnp.concatenate([am[1:, :], zero_row], axis=0)       # row i -> a[i+1]
        acc = jnp.dot(up, w_ref[0], preferred_element_type=jnp.float32)
        acc = acc + jnp.dot(am, w_ref[1], preferred_element_type=jnp.float32)
        acc = acc + jnp.dot(dn, w_ref[2], preferred_element_type=jnp.float32)
        return acc + b_ref[...]                        # (H, W*C) f32

    # conv1 + ReLU, conv2
    h1 = jnp.maximum(conv3x3(x, w1_ref, b1_ref), 0.0)
    conv2 = conv3x3(h1, w2_ref, b2_ref)

    # Channel attention: GAP -> 1x1 -> ReLU -> 1x1 -> sigmoid, all VPU/XLU.
    # wd_ref is the squeeze weight transposed and tiled to (Cm, W*C); the GAP
    # mean is folded into the linear squeeze (sum over H then over lanes).
    inv_hw = 1.0 / float(H * W)
    col_sum = jnp.sum(conv2, axis=0, keepdims=True)                     # (1, W*C)
    z = jnp.sum(wd_ref[...] * col_sum, axis=1, keepdims=True) * inv_hw  # (Cm, 1)
    z = jnp.maximum(z + bd_ref[...], 0.0)                               # (Cm, 1)
    s = jnp.sum(wu_ref[...] * z, axis=0, keepdims=True) + bu_ref[...]   # (1, W*C)
    att = 1.0 / (1.0 + jnp.exp(-s))                                     # sigmoid

    # residual: res_scale * (conv2 * att) + x   (lane-dense store)
    o_ref[0] = conv2 * att * res_scale + x


def _band_weights(w_hwio, W):
    """(3, 3, C, C) HWIO conv weight -> (3, W*C, W*C) block-banded matrices.

    A[ky][j_in*C + ci, j_out*C + co] = w[ky, kx, ci, co] with kx = j_in - j_out + 1
    (zero outside the band), which encodes the kx taps plus W zero-padding.
    """
    C = w_hwio.shape[2]
    bands = []
    for ky in range(3):
        blocks = sum(
            jnp.einsum("pq,io->piqo",
                       jnp.eye(W, k=1 - kx, dtype=w_hwio.dtype),
                       w_hwio[ky, kx])
            for kx in range(3))
        bands.append(blocks.reshape(W * C, W * C))
    return jnp.stack(bands, axis=0)


def rcab_ca_pallas(x_nchw, params, res_scale=1.0, matmul_dtype=jnp.float32):
    """RCAB_CA forward. x_nchw: (N, C, H, W) float32 -> (N, C, H, W)."""
    x = jnp.transpose(x_nchw, (0, 2, 3, 1)).astype(jnp.float32)   # NHWC
    N, H, W, C = x.shape
    Cm = params["wd"].shape[1]
    WC = W * C
    x_flat = x.reshape(N, H, WC)          # fuse W,C onto the lane axis (free)

    # Host-side weight preprocessing (one-time, tiny vs. the conv work).
    w1_band = _band_weights(params["w1"], W).astype(matmul_dtype)   # (3, WC, WC)
    w2_band = _band_weights(params["w2"], W).astype(matmul_dtype)
    b1_wide = jnp.tile(params["b1"].astype(jnp.float32), (1, W))    # (1, WC)
    b2_wide = jnp.tile(params["b2"].astype(jnp.float32), (1, W))
    wdT_wide = jnp.tile(params["wd"].T.astype(jnp.float32), (1, W))  # (Cm, WC)
    bdT = params["bd"].astype(jnp.float32).reshape(Cm, 1)            # (Cm, 1)
    wu_wide = jnp.tile(params["wu"].astype(jnp.float32), (1, W))     # (Cm, WC)
    bu_wide = jnp.tile(params["bu"].astype(jnp.float32), (1, W))     # (1, WC)

    kernel = functools.partial(_rcab_kernel, H=H, W=W, C=C,
                               res_scale=float(res_scale),
                               matmul_dtype=matmul_dtype)

    full = lambda shape: pl.BlockSpec(shape, lambda n: (0,) * len(shape))
    out = pl.pallas_call(
        kernel,
        out_shape=jax.ShapeDtypeStruct((N, H, WC), jnp.float32),
        grid_spec=pltpu.PrefetchScalarGridSpec(
            num_scalar_prefetch=0,
            grid=(N,),
            in_specs=[
                pl.BlockSpec((1, H, WC), lambda n: (n, 0, 0)),  # activations
                full((3, WC, WC)),   # conv1 banded weights (constant -> DMA once)
                full((1, WC)),       # conv1 bias (pre-tiled over W)
                full((3, WC, WC)),   # conv2 banded weights
                full((1, WC)),       # conv2 bias
                full((Cm, WC)),      # CA squeeze weights (transposed + tiled)
                full((Cm, 1)),       # CA squeeze bias
                full((Cm, WC)),      # CA excite weights (tiled)
                full((1, WC)),       # CA excite bias
            ],
            out_specs=pl.BlockSpec((1, H, WC), lambda n: (n, 0, 0)),
        ),
        compiler_params=pltpu.CompilerParams(
            dimension_semantics=("parallel",)),   # batch axis -> v7x 2-TC friendly
    )(x_flat, w1_band, b1_wide, w2_band, b2_wide,
      wdT_wide, bdT, wu_wide, bu_wide)

    return jnp.transpose(out.reshape(N, H, W, C), (0, 3, 1, 2))   # back to NCHW


def rcab_ca_reference(x_nchw, params, res_scale=1.0):
    """Pure-JAX reference (mirrors the PyTorch module)."""
    x = jnp.transpose(x_nchw, (0, 2, 3, 1))
    dn = ("NHWC", "HWIO", "NHWC")
    c1 = lax.conv_general_dilated(x, params["w1"], (1, 1), "SAME",
                                  dimension_numbers=dn) + params["b1"]
    c1 = jnp.maximum(c1, 0.0)
    c2 = lax.conv_general_dilated(c1, params["w2"], (1, 1), "SAME",
                                  dimension_numbers=dn) + params["b2"]
    y = jnp.mean(c2, axis=(1, 2), keepdims=True)              # (N,1,1,C)
    y = jnp.maximum(jnp.einsum("nijc,cd->nijd", y, params["wd"])
                    + params["bd"], 0.0)
    y = jax.nn.sigmoid(jnp.einsum("nijd,dc->nijc", y, params["wu"])
                       + params["bu"])
    res = c2 * y * res_scale
    return jnp.transpose(res + x, (0, 3, 1, 2))


def make_params(key, num_feat, squeeze_factor):
    C, Cm = num_feat, num_feat // squeeze_factor
    ks = jax.random.split(key, 8)
    s = 0.1
    return {
        "w1": jax.random.normal(ks[0], (3, 3, C, C), jnp.float32) * s,
        "b1": jax.random.normal(ks[1], (1, C), jnp.float32) * s,
        "w2": jax.random.normal(ks[2], (3, 3, C, C), jnp.float32) * s,
        "b2": jax.random.normal(ks[3], (1, C), jnp.float32) * s,
        "wd": jax.random.normal(ks[4], (C, Cm), jnp.float32) * s,
        "bd": jax.random.normal(ks[5], (1, Cm), jnp.float32) * s,
        "wu": jax.random.normal(ks[6], (Cm, C), jnp.float32) * s,
        "bu": jax.random.normal(ks[7], (1, C), jnp.float32) * s,
    }


if __name__ == "__main__":
    N, C, H, W = 2, 16, 16, 16
    squeeze_factor = 4
    res_scale = 1.0

    key = jax.random.PRNGKey(0)
    pkey, xkey = jax.random.split(key)
    params = make_params(pkey, C, squeeze_factor)
    x = jax.random.normal(xkey, (N, C, H, W), jnp.float32)  # NCHW, like PyTorch

    ref = jax.block_until_ready(rcab_ca_reference(x, params, res_scale))

    # f32 MXU operands: tight match vs. the XLA conv reference.
    fwd_f32 = jax.jit(functools.partial(rcab_ca_pallas, params=params,
                                        res_scale=res_scale,
                                        matmul_dtype=jnp.float32))
    out_f32 = jax.block_until_ready(fwd_f32(x))
    np.testing.assert_allclose(np.asarray(out_f32), np.asarray(ref),
                               rtol=1e-4, atol=1e-4)

    # bf16 MXU operands (recommended on v6e/v7x), f32 accumulation: loose match.
    fwd_bf16 = jax.jit(functools.partial(rcab_ca_pallas, params=params,
                                         res_scale=res_scale,
                                         matmul_dtype=jnp.bfloat16))
    out_bf16 = jax.block_until_ready(fwd_bf16(x))
    np.testing.assert_allclose(np.asarray(out_bf16), np.asarray(ref),
                               rtol=5e-2, atol=5e-2)

    print("KERNEL_OK")
</pallas_src>

<mosaic_0001>
module attributes {stable_mosaic.version = 11 : i64} {
  func.func @_rcab_kernel(%arg0: i32, %arg1: memref<1x16x256xf32, #tpu.memory_space<vmem>>, %arg2: memref<3x256x256xf32, #tpu.memory_space<vmem>>, %arg3: memref<1x256xf32, #tpu.memory_space<vmem>>, %arg4: memref<3x256x256xf32, #tpu.memory_space<vmem>>, %arg5: memref<1x256xf32, #tpu.memory_space<vmem>>, %arg6: memref<4x256xf32, #tpu.memory_space<vmem>>, %arg7: memref<4x1xf32, #tpu.memory_space<vmem>>, %arg8: memref<4x256xf32, #tpu.memory_space<vmem>>, %arg9: memref<1x256xf32, #tpu.memory_space<vmem>>, %arg10: memref<1x16x256xf32, #tpu.memory_space<vmem>>) attributes {dimension_semantics = [#tpu.dimension_semantics<parallel>], iteration_bounds = array<i64: 2>, scalar_prefetch = 0 : i64, scratch_operands = 0 : i64, tpu.core_type = #tpu.core_type<tc>, window_params = [{transform_indices = @transform_0, window_bounds = array<i64: 1, 16, 256>}, {pipeline_mode = #tpu.pipeline_mode<synchronous>, transform_indices = @transform_1, window_bounds = array<i64: 3, 256, 256>}, {pipeline_mode = #tpu.pipeline_mode<synchronous>, transform_indices = @transform_2, window_bounds = array<i64: 1, 256>}, {pipeline_mode = #tpu.pipeline_mode<synchronous>, transform_indices = @transform_3, window_bounds = array<i64: 3, 256, 256>}, {pipeline_mode = #tpu.pipeline_mode<synchronous>, transform_indices = @transform_4, window_bounds = array<i64: 1, 256>}, {pipeline_mode = #tpu.pipeline_mode<synchronous>, transform_indices = @transform_5, window_bounds = array<i64: 4, 256>}, {pipeline_mode = #tpu.pipeline_mode<synchronous>, transform_indices = @transform_6, window_bounds = array<i64: 4, 1>}, {pipeline_mode = #tpu.pipeline_mode<synchronous>, transform_indices = @transform_7, window_bounds = array<i64: 4, 256>}, {pipeline_mode = #tpu.pipeline_mode<synchronous>, transform_indices = @transform_8, window_bounds = array<i64: 1, 256>}, {transform_indices = @transform_9, window_bounds = array<i64: 1, 16, 256>}]} {
    %c0 = arith.constant 0 : index
    %c0_0 = arith.constant 0 : index
    %c0_1 = arith.constant 0 : index
    %0 = vector.load %arg1[%c0, %c0_0, %c0_1] : memref<1x16x256xf32, #tpu.memory_space<vmem>>, vector<1x16x256xf32>
    %1 = vector.shape_cast %0 : vector<1x16x256xf32> to vector<16x256xf32>
    %cst = arith.constant 0.000000e+00 : f32
    %2 = vector.broadcast %cst : f32 to vector<1x256xf32>
    %3 = vector.extract_strided_slice %1 {offsets = [0, 0], sizes = [15, 256], strides = [1, 1]} : vector<16x256xf32> to vector<15x256xf32>
    %4 = tpu.concatenate %2, %3 in 0 : vector<1x256xf32>, vector<15x256xf32> -> vector<16x256xf32>
    %5 = vector.extract_strided_slice %1 {offsets = [1, 0], sizes = [15, 256], strides = [1, 1]} : vector<16x256xf32> to vector<15x256xf32>
    %6 = tpu.concatenate %5, %2 in 0 : vector<15x256xf32>, vector<1x256xf32> -> vector<16x256xf32>
    %c0_2 = arith.constant 0 : index
    %c0_3 = arith.constant 0 : index
    %c0_4 = arith.constant 0 : index
    %7 = vector.load %arg2[%c0_2, %c0_3, %c0_4] : memref<3x256x256xf32, #tpu.memory_space<vmem>>, vector<1x256x256xf32>
    %8 = vector.shape_cast %7 : vector<1x256x256xf32> to vector<256x256xf32>
    %cst_5 = arith.constant dense<0.000000e+00> : vector<16x256xf32>
    %9 = tpu.matmul %4, %8, %cst_5 {dimension_numbers = #tpu.dot_dimension_numbers<[1], [0], [0], [1], [0, 0, 1, 1], [], []>} : vector<16x256xf32>, vector<256x256xf32>, vector<16x256xf32> -> vector<16x256xf32>
    %c1 = arith.constant 1 : index
    %c0_6 = arith.constant 0 : index
    %c0_7 = arith.constant 0 : index
    %10 = vector.load %arg2[%c1, %c0_6, %c0_7] : memref<3x256x256xf32, #tpu.memory_space<vmem>>, vector<1x256x256xf32>
    %11 = vector.shape_cast %10 : vector<1x256x256xf32> to vector<256x256xf32>
    %cst_8 = arith.constant dense<0.000000e+00> : vector<16x256xf32>
    %12 = tpu.matmul %1, %11, %cst_8 {dimension_numbers = #tpu.dot_dimension_numbers<[1], [0], [0], [1], [0, 0, 1, 1], [], []>} : vector<16x256xf32>, vector<256x256xf32>, vector<16x256xf32> -> vector<16x256xf32>
    %13 = arith.addf %9, %12 : vector<16x256xf32>
    %c2 = arith.constant 2 : index
    %c0_9 = arith.constant 0 : index
    %c0_10 = arith.constant 0 : index
    %14 = vector.load %arg2[%c2, %c0_9, %c0_10] : memref<3x256x256xf32, #tpu.memory_space<vmem>>, vector<1x256x256xf32>
    %15 = vector.shape_cast %14 : vector<1x256x256xf32> to vector<256x256xf32>
    %cst_11 = arith.constant dense<0.000000e+00> : vector<16x256xf32>
    %16 = tpu.matmul %6, %15, %cst_11 {dimension_numbers = #tpu.dot_dimension_numbers<[1], [0], [0], [1], [0, 0, 1, 1], [], []>} : vector<16x256xf32>, vector<256x256xf32>, vector<16x256xf32> -> vector<16x256xf32>
    %17 = arith.addf %13, %16 : vector<16x256xf32>
    %c0_12 = arith.constant 0 : index
    %c0_13 = arith.constant 0 : index
    %18 = vector.load %arg3[%c0_12, %c0_13] : memref<1x256xf32, #tpu.memory_space<vmem>>, vector<1x256xf32>
    %19 = vector.broadcast %18 : vector<1x256xf32> to vector<16x256xf32>
    %20 = arith.addf %17, %19 : vector<16x256xf32>
    %cst_14 = arith.constant 0.000000e+00 : f32
    %21 = vector.broadcast %cst_14 : f32 to vector<16x256xf32>
    %22 = arith.maximumf %20, %21 : vector<16x256xf32>
    %23 = vector.extract_strided_slice %22 {offsets = [0, 0], sizes = [15, 256], strides = [1, 1]} : vector<16x256xf32> to vector<15x256xf32>
    %24 = tpu.concatenate %2, %23 in 0 : vector<1x256xf32>, vector<15x256xf32> -> vector<16x256xf32>
    %25 = vector.extract_strided_slice %22 {offsets = [1, 0], sizes = [15, 256], strides = [1, 1]} : vector<16x256xf32> to vector<15x256xf32>
    %26 = tpu.concatenate %25, %2 in 0 : vector<15x256xf32>, vector<1x256xf32> -> vector<16x256xf32>
    %c0_15 = arith.constant 0 : index
    %c0_16 = arith.constant 0 : index
    %c0_17 = arith.constant 0 : index
    %27 = vector.load %arg4[%c0_15, %c0_16, %c0_17] : memref<3x256x256xf32, #tpu.memory_space<vmem>>, vector<1x256x256xf32>
    %28 = vector.shape_cast %27 : vector<1x256x256xf32> to vector<256x256xf32>
    %cst_18 = arith.constant dense<0.000000e+00> : vector<16x256xf32>
    %29 = tpu.matmul %24, %28, %cst_18 {dimension_numbers = #tpu.dot_dimension_numbers<[1], [0], [0], [1], [0, 0, 1, 1], [], []>} : vector<16x256xf32>, vector<256x256xf32>, vector<16x256xf32> -> vector<16x256xf32>
    %c1_19 = arith.constant 1 : index
    %c0_20 = arith.constant 0 : index
    %c0_21 = arith.constant 0 : index
    %30 = vector.load %arg4[%c1_19, %c0_20, %c0_21] : memref<3x256x256xf32, #tpu.memory_space<vmem>>, vector<1x256x256xf32>
    %31 = vector.shape_cast %30 : vector<1x256x256xf32> to vector<256x256xf32>
    %cst_22 = arith.constant dense<0.000000e+00> : vector<16x256xf32>
    %32 = tpu.matmul %22, %31, %cst_22 {dimension_numbers = #tpu.dot_dimension_numbers<[1], [0], [0], [1], [0, 0, 1, 1], [], []>} : vector<16x256xf32>, vector<256x256xf32>, vector<16x256xf32> -> vector<16x256xf32>
    %33 = arith.addf %29, %32 : vector<16x256xf32>
    %c2_23 = arith.constant 2 : index
    %c0_24 = arith.constant 0 : index
    %c0_25 = arith.constant 0 : index
    %34 = vector.load %arg4[%c2_23, %c0_24, %c0_25] : memref<3x256x256xf32, #tpu.memory_space<vmem>>, vector<1x256x256xf32>
    %35 = vector.shape_cast %34 : vector<1x256x256xf32> to vector<256x256xf32>
    %cst_26 = arith.constant dense<0.000000e+00> : vector<16x256xf32>
    %36 = tpu.matmul %26, %35, %cst_26 {dimension_numbers = #tpu.dot_dimension_numbers<[1], [0], [0], [1], [0, 0, 1, 1], [], []>} : vector<16x256xf32>, vector<256x256xf32>, vector<16x256xf32> -> vector<16x256xf32>
    %37 = arith.addf %33, %36 : vector<16x256xf32>
    %c0_27 = arith.constant 0 : index
    %c0_28 = arith.constant 0 : index
    %38 = vector.load %arg5[%c0_27, %c0_28] : memref<1x256xf32, #tpu.memory_space<vmem>>, vector<1x256xf32>
    %39 = vector.broadcast %38 : vector<1x256xf32> to vector<16x256xf32>
    %40 = arith.addf %37, %39 : vector<16x256xf32>
    %cst_29 = arith.constant dense<0.000000e+00> : vector<256xf32>
    %41 = vector.multi_reduction <add>, %40, %cst_29 [0] : vector<16x256xf32> to vector<256xf32>
    %42 = vector.shape_cast %41 : vector<256xf32> to vector<1x256xf32>
    %c0_30 = arith.constant 0 : index
    %c0_31 = arith.constant 0 : index
    %43 = vector.load %arg6[%c0_30, %c0_31] : memref<4x256xf32, #tpu.memory_space<vmem>>, vector<4x256xf32>
    %44 = vector.broadcast %42 : vector<1x256xf32> to vector<4x256xf32>
    %45 = arith.mulf %43, %44 : vector<4x256xf32>
    %cst_32 = arith.constant dense<0.000000e+00> : vector<4xf32>
    %46 = vector.multi_reduction <add>, %45, %cst_32 [1] : vector<4x256xf32> to vector<4xf32>
    %47 = vector.shape_cast %46 : vector<4xf32> to vector<4x1xf32>
    %cst_33 = arith.constant 3.906250e-03 : f32
    %48 = vector.broadcast %cst_33 : f32 to vector<4x1xf32>
    %49 = arith.mulf %47, %48 : vector<4x1xf32>
    %c0_34 = arith.constant 0 : index
    %c0_35 = arith.constant 0 : index
    %50 = vector.load %arg7[%c0_34, %c0_35] : memref<4x1xf32, #tpu.memory_space<vmem>>, vector<4x1xf32>
    %51 = arith.addf %49, %50 : vector<4x1xf32>
    %cst_36 = arith.constant 0.000000e+00 : f32
    %52 = vector.broadcast %cst_36 : f32 to vector<4x1xf32>
    %53 = arith.maximumf %51, %52 : vector<4x1xf32>
    %c0_37 = arith.constant 0 : index
    %c0_38 = arith.constant 0 : index
    %54 = vector.load %arg8[%c0_37, %c0_38] : memref<4x256xf32, #tpu.memory_space<vmem>>, vector<4x256xf32>
    %55 = vector.broadcast %53 : vector<4x1xf32> to vector<4x256xf32>
    %56 = arith.mulf %54, %55 : vector<4x256xf32>
    %cst_39 = arith.constant dense<0.000000e+00> : vector<256xf32>
    %57 = vector.multi_reduction <add>, %56, %cst_39 [0] : vector<4x256xf32> to vector<256xf32>
    %58 = vector.shape_cast %57 : vector<256xf32> to vector<1x256xf32>
    %c0_40 = arith.constant 0 : index
    %c0_41 = arith.constant 0 : index
    %59 = vector.load %arg9[%c0_40, %c0_41] : memref<1x256xf32, #tpu.memory_space<vmem>>, vector<1x256xf32>
    %60 = arith.addf %58, %59 : vector<1x256xf32>
    %cst_42 = arith.constant 0.000000e+00 : f32
    %61 = vector.broadcast %cst_42 : f32 to vector<1x256xf32>
    %62 = arith.subf %61, %60 : vector<1x256xf32>
    %63 = math.exp %62 : vector<1x256xf32>
    %cst_43 = arith.constant 1.000000e+00 : f32
    %64 = vector.broadcast %cst_43 : f32 to vector<1x256xf32>
    %65 = arith.addf %64, %63 : vector<1x256xf32>
    %cst_44 = arith.constant 1.000000e+00 : f32
    %66 = vector.broadcast %cst_44 : f32 to vector<1x256xf32>
    %67 = arith.divf %66, %65 : vector<1x256xf32>
    %68 = vector.broadcast %67 : vector<1x256xf32> to vector<16x256xf32>
    %69 = arith.mulf %40, %68 : vector<16x256xf32>
    %cst_45 = arith.constant 1.000000e+00 : f32
    %70 = vector.broadcast %cst_45 : f32 to vector<16x256xf32>
    %71 = arith.mulf %69, %70 : vector<16x256xf32>
    %72 = arith.addf %71, %1 : vector<16x256xf32>
    %c0_46 = arith.constant 0 : index
    %c0_47 = arith.constant 0 : index
    %c0_48 = arith.constant 0 : index
    %73 = vector.load %arg10[%c0_46, %c0_47, %c0_48] : memref<1x16x256xf32, #tpu.memory_space<vmem>>, vector<1x16x256xf32>
    %74 = vector.shape_cast %73 : vector<1x16x256xf32> to vector<16x256xf32>
    %75 = vector.shape_cast %72 : vector<16x256xf32> to vector<1x16x256xf32>
    tpu.vector_store %arg10[%c0_46, %c0_47, %c0_48], %75 {strides = array<i32>} : memref<1x16x256xf32, #tpu.memory_space<vmem>>, vector<1x16x256xf32>,
    return
  }
  func.func @transform_0(%arg0: i32) -> (i32, i32, i32) {
    %c0_i32 = arith.constant 0 : i32
    %c0_i32_0 = arith.constant 0 : i32
    %c0_i32_1 = arith.constant 0 : i32
    return %arg0, %c0_i32, %c0_i32_0 : i32, i32, i32
  }
  func.func @transform_1(%arg0: i32) -> (i32, i32, i32) {
    %c0_i32 = arith.constant 0 : i32
    %c0_i32_0 = arith.constant 0 : i32
    %c0_i32_1 = arith.constant 0 : i32
    %c0_i32_2 = arith.constant 0 : i32
    return %c0_i32, %c0_i32_0, %c0_i32_1 : i32, i32, i32
  }
  func.func @transform_2(%arg0: i32) -> (i32, i32) {
    %c0_i32 = arith.constant 0 : i32
    %c0_i32_0 = arith.constant 0 : i32
    %c0_i32_1 = arith.constant 0 : i32
    return %c0_i32, %c0_i32_0 : i32, i32
  }
  func.func @transform_3(%arg0: i32) -> (i32, i32, i32) {
    %c0_i32 = arith.constant 0 : i32
    %c0_i32_0 = arith.constant 0 : i32
    %c0_i32_1 = arith.constant 0 : i32
    %c0_i32_2 = arith.constant 0 : i32
    return %c0_i32, %c0_i32_0, %c0_i32_1 : i32, i32, i32
  }
  func.func @transform_4(%arg0: i32) -> (i32, i32) {
    %c0_i32 = arith.constant 0 : i32
    %c0_i32_0 = arith.constant 0 : i32
    %c0_i32_1 = arith.constant 0 : i32
    return %c0_i32, %c0_i32_0 : i32, i32
  }
  func.func @transform_5(%arg0: i32) -> (i32, i32) {
    %c0_i32 = arith.constant 0 : i32
    %c0_i32_0 = arith.constant 0 : i32
    %c0_i32_1 = arith.constant 0 : i32
    return %c0_i32, %c0_i32_0 : i32, i32
  }
  func.func @transform_6(%arg0: i32) -> (i32, i32) {
    %c0_i32 = arith.constant 0 : i32
    %c0_i32_0 = arith.constant 0 : i32
    %c0_i32_1 = arith.constant 0 : i32
    return %c0_i32, %c0_i32_0 : i32, i32
  }
  func.func @transform_7(%arg0: i32) -> (i32, i32) {
    %c0_i32 = arith.constant 0 : i32
    %c0_i32_0 = arith.constant 0 : i32
    %c0_i32_1 = arith.constant 0 : i32
    return %c0_i32, %c0_i32_0 : i32, i32
  }
  func.func @transform_8(%arg0: i32) -> (i32, i32) {
    %c0_i32 = arith.constant 0 : i32
    %c0_i32_0 = arith.constant 0 : i32
    %c0_i32_1 = arith.constant 0 : i32
    return %c0_i32, %c0_i32_0 : i32, i32
  }
  func.func @transform_9(%arg0: i32) -> (i32, i32, i32) {
    %c0_i32 = arith.constant 0 : i32
    %c0_i32_0 = arith.constant 0 : i32
    %c0_i32_1 = arith.constant 0 : i32
    return %arg0, %c0_i32, %c0_i32_0 : i32, i32, i32
  }
}

</mosaic_0001>

<llo_original>
// kernel: tile.31
$region0: #{tile.31}
  %s0 = inlined_call_operand.vmem [shape: f32[4,16,16], index: 0, kind: input, shape index: {}]
  %s1 = inlined_call_operand.vmem [shape: f32[4,256], index: 1, kind: output, shape index: {}]
  $region1: #{tile.31} parent=0
    #allocation0 [shape = 'u8[8192]{0}', space=vmem, size = 0x2000, scoped, tag = 'scoped mem for output reshape']
    %v2 = vld [vmem:[%s0] ss:$8 sm:$0xf]
    %v3 = vld [vmem:[%s0] ss:$8 sm:$0xf0]
    %vm4 = vcmask 1047556
    %v5 = vsel %vm4, %v3, %v2
    %vm6 = vcmask 130048
    %7 = vst.msk [vmem:[#allocation0] ss:$8 sm:$0x3] %vm6, %v5
    %s8 = scalar_lea.vmem [#allocation0], 4294967281
    %9 = vst.msk [vmem:[%s8] ss:$8 sm:$0xc] %vm6, %v5
    %s10 = scalar_lea.vmem [#allocation0], 4294967266
    %11 = vst.msk [vmem:[%s10] ss:$8 sm:$0x30] %vm6, %v5
    %s12 = scalar_lea.vmem [#allocation0], 4294967251
    %13 = vst.msk [vmem:[%s12] ss:$8 sm:$0xc0] %vm6, %v5
    %s14 = scalar_lea.vmem %s0, 7
    %s15 = smov 3
    %v16 = vld [vmem:[%s14] ss:$16 sm:%s15]
    %s17 = scalar_lea.vmem %s0, 7
    %s18 = smov 12
    %v19 = vld [vmem:[%s17] ss:$16 sm:%s18]
    %vm20 = vcmask 1043458
    %v21 = vsel %vm20, %v19, %v16
    %s22 = scalar_lea.vmem %s0, 4294967247
    %s23 = smov 48
    %v24 = vld [vmem:[%s22] ss:$16 sm:%s23]
    %vm25 = vcmask 1045508
    %v26 = vsel %vm25, %v24, %v21
    %s27 = scalar_lea.vmem %s0, 4294967247
    %s28 = smov 192
    %v29 = vld [vmem:[%s27] ss:$16 sm:%s28]
    %vm30 = vcmask 1047558
    %v31 = vsel %vm30, %v29, %v26
    %32 = vrot.lane.b32.xlu0 %v31, 112
    %v33 = vpop.permute.xlu0 %32
    %vm34 = vcmask 1048448
    %35 = vst.msk [vmem:[#allocation0] sm:$0xf] %vm34, %v33
    %s36 = scalar_lea.vmem [#allocation0], 4
    %37 = vst.msk [vmem:[%s36] sm:$0xf0] %vm34, %v33
    %s38 = scalar_lea.vmem %s0, 6
    %s39 = smov 3
    %v40 = vld [vmem:[%s38] ss:$16 sm:%s39]
    %s41 = scalar_lea.vmem %s0, 6
    %s42 = smov 12
    %v43 = vld [vmem:[%s41] ss:$16 sm:%s42]
    %vm44 = vcmask 1043458
    %v45 = vsel %vm44, %v43, %v40
    %s46 = scalar_lea.vmem %s0, 4294967246
    %s47 = smov 48
    %v48 = vld [vmem:[%s46] ss:$16 sm:%s47]
    %vm49 = vcmask 1045508
    %v50 = vsel %vm49, %v48, %v45
    %s51 = scalar_lea.vmem %s0, 4294967246
    %s52 = smov 192
    %v53 = vld [vmem:[%s51] ss:$16 sm:%s52]
    %vm54 = vcmask 1047558
    %v55 = vsel %vm54, %v53, %v50
    %56 = vrot.lane.b32.xlu0 %v55, 96
    %v57 = vpop.permute.xlu0 %56
    %vm58 = vcmask 917248
    %59 = vst.msk [vmem:[#allocation0] sm:$0xf] %vm58, %v57
    %s60 = scalar_lea.vmem [#allocation0], 4
    %61 = vst.msk [vmem:[%s60] sm:$0xf0] %vm58, %v57
    %s62 = scalar_lea.vmem %s0, 5
    %s63 = smov 3
    %v64 = vld [vmem:[%s62] ss:$16 sm:%s63]
    %s65 = scalar_lea.vmem %s0, 5
    %s66 = smov 12
    %v67 = vld [vmem:[%s65] ss:$16 sm:%s66]
    %vm68 = vcmask 1043458
    %v69 = vsel %vm68, %v67, %v64
    %s70 = scalar_lea.vmem %s0, 4294967245
    %s71 = smov 48
    %v72 = vld [vmem:[%s70] ss:$16 sm:%s71]
    %vm73 = vcmask 1045508
    %v74 = vsel %vm73, %v72, %v69
    %s75 = scalar_lea.vmem %s0, 4294967245
    %s76 = smov 192
    %v77 = vld [vmem:[%s75] ss:$16 sm:%s76]
    %vm78 = vcmask 1047558
    %v79 = vsel %vm78, %v77, %v74
    %80 = vrot.lane.b32.xlu0 %v79, 80
    %v81 = vpop.permute.xlu0 %80
    %vm82 = vcmask 786048
    %83 = vst.msk [vmem:[#allocation0] sm:$0xf] %vm82, %v81
    %s84 = scalar_lea.vmem [#allocation0], 4
    %85 = vst.msk [vmem:[%s84] sm:$0xf0] %vm82, %v81
    %s86 = scalar_lea.vmem %s0, 4
    %s87 = smov 3
    %v88 = vld [vmem:[%s86] ss:$16 sm:%s87]
    %s89 = scalar_lea.vmem %s0, 4
    %s90 = smov 12
    %v91 = vld [vmem:[%s89] ss:$16 sm:%s90]
    %vm92 = vcmask 1043458
    %v93 = vsel %vm92, %v91, %v88
    %s94 = scalar_lea.vmem %s0, 4294967244
    %s95 = smov 48
    %v96 = vld [vmem:[%s94] ss:$16 sm:%s95]
    %vm97 = vcmask 1045508
    %v98 = vsel %vm97, %v96, %v93
    %s99 = scalar_lea.vmem %s0, 4294967244
    %s100 = smov 192
    %v101 = vld [vmem:[%s99] ss:$16 sm:%s100]
    %vm102 = vcmask 1047558
    %v103 = vsel %vm102, %v101, %v98
    %104 = vrot.lane.b32.xlu0 %v103, 64
    %v105 = vpop.permute.xlu0 %104
    %vm106 = vcmask 654848
    %107 = vst.msk [vmem:[#allocation0] sm:$0xf] %vm106, %v105
    %s108 = scalar_lea.vmem [#allocation0], 4
    %109 = vst.msk [vmem:[%s108] sm:$0xf0] %vm106, %v105
    %s110 = scalar_lea.vmem %s0, 3
    %s111 = smov 3
    %v112 = vld [vmem:[%s110] ss:$16 sm:%s111]
    %s113 = scalar_lea.vmem %s0, 3
    %s114 = smov 12
    %v115 = vld [vmem:[%s113] ss:$16 sm:%s114]
    %vm116 = vcmask 1043458
    %v117 = vsel %vm116, %v115, %v112
    %s118 = scalar_lea.vmem %s0, 4294967243
    %s119 = smov 48
    %v120 = vld [vmem:[%s118] ss:$16 sm:%s119]
    %vm121 = vcmask 1045508
    %v122 = vsel %vm121, %v120, %v117
    %s123 = scalar_lea.vmem %s0, 4294967243
    %s124 = smov 192
    %v125 = vld [vmem:[%s123] ss:$16 sm:%s124]
    %vm126 = vcmask 1047558
    %v127 = vsel %vm126, %v125, %v122
    %128 = vrot.lane.b32.xlu0 %v127, 48
    %v129 = vpop.permute.xlu0 %128
    %vm130 = vcmask 523648
    %131 = vst.msk [vmem:[#allocation0] sm:$0xf] %vm130, %v129
    %s132 = scalar_lea.vmem [#allocation0], 4
    %133 = vst.msk [vmem:[%s132] sm:$0xf0] %vm130, %v129
    %s134 = scalar_lea.vmem %s0, 2
    %s135 = smov 3
    %v136 = vld [vmem:[%s134] ss:$16 sm:%s135]
    %s137 = scalar_lea.vmem %s0, 2
    %s138 = smov 12
    %v139 = vld [vmem:[%s137] ss:$16 sm:%s138]
    %vm140 = vcmask 1043458
    %v141 = vsel %vm140, %v139, %v136
    %s142 = scalar_lea.vmem %s0, 4294967242
    %s143 = smov 48
    %v144 = vld [vmem:[%s142] ss:$16 sm:%s143]
    %vm145 = vcmask 1045508
    %v146 = vsel %vm145, %v144, %v141
    %s147 = scalar_lea.vmem %s0, 4294967242
    %s148 = smov 192
    %v149 = vld [vmem:[%s147] ss:$16 sm:%s148]
    %vm150 = vcmask 1047558
    %v151 = vsel %vm150, %v149, %v146
    %152 = vrot.lane.b32.xlu0 %v151, 32
    %v153 = vpop.permute.xlu0 %152
    %vm154 = vcmask 392448
    %155 = vst.msk [vmem:[#allocation0] sm:$0xf] %vm154, %v153
    %s156 = scalar_lea.vmem [#allocation0], 4
    %157 = vst.msk [vmem:[%s156] sm:$0xf0] %vm154, %v153
    %s158 = scalar_lea.vmem %s0, 1
    %s159 = smov 3
    %v160 = vld [vmem:[%s158] ss:$16 sm:%s159]
    %s161 = scalar_lea.vmem %s0, 1
    %s162 = smov 12
    %v163 = vld [vmem:[%s161] ss:$16 sm:%s162]
    %vm164 = vcmask 1043458
    %v165 = vsel %vm164, %v163, %v160
    %s166 = scalar_lea.vmem %s0, 4294967241
    %s167 = smov 48
    %v168 = vld [vmem:[%s166] ss:$16 sm:%s167]
    %vm169 = vcmask 1045508
    %v170 = vsel %vm169, %v168, %v165
    %s171 = scalar_lea.vmem %s0, 4294967241
    %s172 = smov 192
    %v173 = vld [vmem:[%s171] ss:$16 sm:%s172]
    %vm174 = vcmask 1047558
    %v175 = vsel %vm174, %v173, %v170
    %176 = vrot.lane.b32.xlu0 %v175, 16
    %v177 = vpop.permute.xlu0 %176
    %vm178 = vcmask 261248
    %179 = vst.msk [vmem:[#allocation0] sm:$0xf] %vm178, %v177
    %s180 = scalar_lea.vmem [#allocation0], 4
    %181 = vst.msk [vmem:[%s180] sm:$0xf0] %vm178, %v177
    %s183 = sshll.u32 1, 4
    %s184 = ssub.s32 %s183, 1
    %v186 = vld [vmem:[#allocation0] sm:%s184]
    %s187 = sshll.u32 1, 4
    %s188 = ssub.s32 %s187, 1
    %189 = vst [vmem:[%s1] sm:%s188] %v186
    %s190 = scalar_lea.vmem [#allocation0], 8
    %v191 = vld [vmem:[%s190] sm:%s184]
    %s192 = sshll.u32 1, 4
    %s193 = ssub.s32 %s192, 1
    %s194 = scalar_lea.vmem %s1, 4
    %195 = vst [vmem:[%s194] sm:%s193] %v191

// kernel: rcab_ca_pallas.1
$region0: #{rcab_ca_pallas.1}
  #allocation0 [shape = 'u32[]', space=smem, size = 0x4, offset = 0x4, fixed_abs, tag = 'smem constant byte address 0x4 - core index']
  #allocation1 [shape = 'u32[144,128]{1,0:T(1,128)}', space=vmem, size = 0x12000, scoped, tag = 'internal scratch']
  %s0 = inlined_call_operand.vmem [shape: f32[2,16,256], index: 0, kind: input, shape index: {}]
  %s1 = inlined_call_operand.vmem [shape: f32[3,256,256], index: 1, kind: input, shape index: {}]
  %s2 = inlined_call_operand.vmem [shape: f32[1,256], index: 2, kind: input, shape index: {}]
  %s3 = inlined_call_operand.vmem [shape: f32[3,256,256], index: 3, kind: input, shape index: {}]
  %s4 = inlined_call_operand.vmem [shape: f32[1,256], index: 4, kind: input, shape index: {}]
  %s5 = inlined_call_operand.vmem [shape: f32[4,256], index: 5, kind: input, shape index: {}]
  %s6 = inlined_call_operand.vmem [shape: f32[4,1], index: 6, kind: input, shape index: {}]
  %s7 = inlined_call_operand.vmem [shape: f32[4,256], index: 7, kind: input, shape index: {}]
  %s8 = inlined_call_operand.vmem [shape: f32[1,256], index: 8, kind: input, shape index: {}]
  %s9 = inlined_call_operand.vmem [shape: f32[2,16,256], index: 9, kind: output, shape index: {}]
  %s10 = sld [smem:[#allocation0]]
  $region69: #{rcab_ca_pallas.1} parent=0
    _
  %s12 = ssub.s32 1, %s10
  %s13 = scalar_select 0, %s12, %s10
  loop: start=0, step=1, limit=4
  $region2: #{rcab_ca_pallas.1} parent=0 // loop_pre_header
    _
  $region3: #{rcab_ca_pallas.1} parent=0 // loop_header
    %s15 = sphi 0, %s19
    %p16 = scmp.ge.s32.totalorder %s15, 4
    %s25 = sphi 0, %s27
    %s28 = sphi 0, %s25
    %s29 = sphi 0, %s28
    %s45 = sphi 0, %s29
    %s49 = sphi 0, %s49
    %s51 = sphi 0, %s49
    %s52 = sphi 0, %s51
    %s66 = sphi 0, %s52
    %s70 = sphi 0, %s70
    %s72 = sphi 0, %s70
    %s73 = sphi 0, %s72
    %s87 = sphi 0, %s73
    %s91 = sphi 0, %s91
    %s93 = sphi 0, %s91
    %s94 = sphi 0, %s93
    %s108 = sphi 0, %s94
    %s112 = sphi 0, %s112
    %s114 = sphi 0, %s112
    %s115 = sphi 0, %s114
    %s129 = sphi 0, %s115
    %s133 = sphi 0, %s133
    %s135 = sphi 0, %s133
    %s136 = sphi 0, %s135
    %s150 = sphi 0, %s136
    %s154 = sphi 0, %s154
    %s156 = sphi 0, %s154
    %s157 = sphi 0, %s156
    %s171 = sphi 0, %s157
    %s175 = sphi 0, %s175
    %s177 = sphi 0, %s175
    %s178 = sphi 0, %s177
    %s192 = sphi 0, %s178
    %s196 = sphi 0, %s196
    %s198 = sphi 0, %s196
    %s199 = sphi 0, %s198
    %s213 = sphi 0, %s199
    %s219 = sphi 0, %s221
    %s222 = sphi 0, %s219
    %s223 = sphi 0, %s222
    %s239 = sphi 0, %s223
  $region4: #{rcab_ca_pallas.1} parent=0 // loop_header_branch
    %18 = sbr.rel (%p16) target = $region8
  $region5: #{rcab_ca_pallas.1} parent=0 // loop_body
    %s20 = ssub.s32 %s15, 1
    %s21 = ssub.s32 %s15, 2
    %s22 = sadd.s32 %s15, 1
    %s23 = ssub.s32 %s15, %s22
    %p24 = scmp.eq.s32.totalorder %s23, 0
    %s26 = sadd.s32 %s25, 1
    %s27 = scalar_select %p24, %s25, %s26
    %p30 = pneg %p24
    %p31 = scmp.eq.s32.totalorder %s15, 1
    %p32 = por %p30, %p31
    %p33 = scmp.ne.s32.totalorder %s25, %s28
    %p34 = scmp.eq.s32.totalorder %s15, 0
    %p35 = por %p33, %p34
    %p36 = scmp.ne.s32.totalorder %s25, %s28
    %p37 = scmp.eq.s32.totalorder %s20, 1
    %p38 = por %p36, %p37
    %p39 = scmp.ne.s32.totalorder %s28, %s29
    %p40 = scmp.eq.s32.totalorder %s20, 0
    %p41 = por %p39, %p40
    %p42 = scmp.ne.s32.totalorder %s28, %s29
    %p43 = scmp.eq.s32.totalorder %s21, 1
    %p44 = por %p42, %p43
    %p46 = scmp.ne.s32.totalorder %s29, %s45
    %p47 = scmp.eq.s32.totalorder %s21, 0
    %p48 = por %p46, %p47
    %s50 = sadd.s32 %s49, 1
    %p53 = scmp.eq.s32.totalorder %s15, 1
    %p54 = scmp.ne.s32.totalorder %s49, %s51
    %p55 = scmp.eq.s32.totalorder %s15, 0
    %p56 = por %p54, %p55
    %p57 = scmp.ne.s32.totalorder %s49, %s51
    %p58 = scmp.eq.s32.totalorder %s20, 1
    %p59 = por %p57, %p58
    %p60 = scmp.ne.s32.totalorder %s51, %s52
    %p61 = scmp.eq.s32.totalorder %s20, 0
    %p62 = por %p60, %p61
    %p63 = scmp.ne.s32.totalorder %s51, %s52
    %p64 = scmp.eq.s32.totalorder %s21, 1
    %p65 = por %p63, %p64
    %p67 = scmp.ne.s32.totalorder %s52, %s66
    %p68 = scmp.eq.s32.totalorder %s21, 0
    %p69 = por %p67, %p68
    %s71 = sadd.s32 %s70, 1
    %p74 = scmp.eq.s32.totalorder %s15, 1
    %p75 = scmp.ne.s32.totalorder %s70, %s72
    %p76 = scmp.eq.s32.totalorder %s15, 0
    %p77 = por %p75, %p76
    %p78 = scmp.ne.s32.totalorder %s70, %s72
    %p79 = scmp.eq.s32.totalorder %s20, 1
    %p80 = por %p78, %p79
    %p81 = scmp.ne.s32.totalorder %s72, %s73
    %p82 = scmp.eq.s32.totalorder %s20, 0
    %p83 = por %p81, %p82
    %p84 = scmp.ne.s32.totalorder %s72, %s73
    %p85 = scmp.eq.s32.totalorder %s21, 1
    %p86 = por %p84, %p85
    %p88 = scmp.ne.s32.totalorder %s73, %s87
    %p89 = scmp.eq.s32.totalorder %s21, 0
    %p90 = por %p88, %p89
    %s92 = sadd.s32 %s91, 1
    %p95 = scmp.eq.s32.totalorder %s15, 1
    %p96 = scmp.ne.s32.totalorder %s91, %s93
    %p97 = scmp.eq.s32.totalorder %s15, 0
    %p98 = por %p96, %p97
    %p99 = scmp.ne.s32.totalorder %s91, %s93
    %p100 = scmp.eq.s32.totalorder %s20, 1
    %p101 = por %p99, %p100
    %p102 = scmp.ne.s32.totalorder %s93, %s94
    %p103 = scmp.eq.s32.totalorder %s20, 0
    %p104 = por %p102, %p103
    %p105 = scmp.ne.s32.totalorder %s93, %s94
    %p106 = scmp.eq.s32.totalorder %s21, 1
    %p107 = por %p105, %p106
    %p109 = scmp.ne.s32.totalorder %s94, %s108
    %p110 = scmp.eq.s32.totalorder %s21, 0
    %p111 = por %p109, %p110
    %s113 = sadd.s32 %s112, 1
    %p116 = scmp.eq.s32.totalorder %s15, 1
    %p117 = scmp.ne.s32.totalorder %s112, %s114
    %p118 = scmp.eq.s32.totalorder %s15, 0
    %p119 = por %p117, %p118
    %p120 = scmp.ne.s32.totalorder %s112, %s114
    %p121 = scmp.eq.s32.totalorder %s20, 1
    %p122 = por %p120, %p121
    %p123 = scmp.ne.s32.totalorder %s114, %s115
    %p124 = scmp.eq.s32.totalorder %s20, 0
    %p125 = por %p123, %p124
    %p126 = scmp.ne.s32.totalorder %s114, %s115
    %p127 = scmp.eq.s32.totalorder %s21, 1
    %p128 = por %p126, %p127
    %p130 = scmp.ne.s32.totalorder %s115, %s129
    %p131 = scmp.eq.s32.totalorder %s21, 0
    %p132 = por %p130, %p131
    %s134 = sadd.s32 %s133, 1
    %p137 = scmp.eq.s32.totalorder %s15, 1
    %p138 = scmp.ne.s32.totalorder %s133, %s135
    %p139 = scmp.eq.s32.totalorder %s15, 0
    %p140 = por %p138, %p139
    %p141 = scmp.ne.s32.totalorder %s133, %s135
    %p142 = scmp.eq.s32.totalorder %s20, 1
    %p143 = por %p141, %p142
    %p144 = scmp.ne.s32.totalorder %s135, %s136
    %p145 = scmp.eq.s32.totalorder %s20, 0
    %p146 = por %p144, %p145
    %p147 = scmp.ne.s32.totalorder %s135, %s136
    %p148 = scmp.eq.s32.totalorder %s21, 1
    %p149 = por %p147, %p148
    %p151 = scmp.ne.s32.totalorder %s136, %s150
    %p152 = scmp.eq.s32.totalorder %s21, 0
    %p153 = por %p151, %p152
    %s155 = sadd.s32 %s154, 1
    %p158 = scmp.eq.s32.totalorder %s15, 1
    %p159 = scmp.ne.s32.totalorder %s154, %s156
    %p160 = scmp.eq.s32.totalorder %s15, 0
    %p161 = por %p159, %p160
    %p162 = scmp.ne.s32.totalorder %s154, %s156
    %p163 = scmp.eq.s32.totalorder %s20, 1
    %p164 = por %p162, %p163
    %p165 = scmp.ne.s32.totalorder %s156, %s157
    %p166 = scmp.eq.s32.totalorder %s20, 0
    %p167 = por %p165, %p166
    %p168 = scmp.ne.s32.totalorder %s156, %s157
    %p169 = scmp.eq.s32.totalorder %s21, 1
    %p170 = por %p168, %p169
    %p172 = scmp.ne.s32.totalorder %s157, %s171
    %p173 = scmp.eq.s32.totalorder %s21, 0
    %p174 = por %p172, %p173
    %s176 = sadd.s32 %s175, 1
    %p179 = scmp.eq.s32.totalorder %s15, 1
    %p180 = scmp.ne.s32.totalorder %s175, %s177
    %p181 = scmp.eq.s32.totalorder %s15, 0
    %p182 = por %p180, %p181
    %p183 = scmp.ne.s32.totalorder %s175, %s177
    %p184 = scmp.eq.s32.totalorder %s20, 1
    %p185 = por %p183, %p184
    %p186 = scmp.ne.s32.totalorder %s177, %s178
    %p187 = scmp.eq.s32.totalorder %s20, 0
    %p188 = por %p186, %p187
    %p189 = scmp.ne.s32.totalorder %s177, %s178
    %p190 = scmp.eq.s32.totalorder %s21, 1
    %p191 = por %p189, %p190
    %p193 = scmp.ne.s32.totalorder %s178, %s192
    %p194 = scmp.eq.s32.totalorder %s21, 0
    %p195 = por %p193, %p194
    %s197 = sadd.s32 %s196, 1
    %p200 = scmp.eq.s32.totalorder %s15, 1
    %p201 = scmp.ne.s32.totalorder %s196, %s198
    %p202 = scmp.eq.s32.totalorder %s15, 0
    %p203 = por %p201, %p202
    %p204 = scmp.ne.s32.totalorder %s196, %s198
    %p205 = scmp.eq.s32.totalorder %s20, 1
    %p206 = por %p204, %p205
    %p207 = scmp.ne.s32.totalorder %s198, %s199
    %p208 = scmp.eq.s32.totalorder %s20, 0
    %p209 = por %p207, %p208
    %p210 = scmp.ne.s32.totalorder %s198, %s199
    %p211 = scmp.eq.s32.totalorder %s21, 1
    %p212 = por %p210, %p211
    %p214 = scmp.ne.s32.totalorder %s199, %s213
    %p215 = scmp.eq.s32.totalorder %s21, 0
    %p216 = por %p214, %p215
    %s217 = ssub.s32 %s15, %s22
    %p218 = scmp.eq.s32.totalorder %s217, 0
    %s220 = sadd.s32 %s219, 1
    %s221 = scalar_select %p218, %s219, %s220
    %p224 = pneg %p218
    %p225 = scmp.eq.s32.totalorder %s15, 1
    %p226 = por %p224, %p225
    %p227 = scmp.ne.s32.totalorder %s219, %s222
    %p228 = scmp.eq.s32.totalorder %s15, 0
    %p229 = por %p227, %p228
    %p230 = scmp.ne.s32.totalorder %s219, %s222
    %p231 = scmp.eq.s32.totalorder %s20, 1
    %p232 = por %p230, %p231
    %p233 = scmp.ne.s32.totalorder %s222, %s223
    %p234 = scmp.eq.s32.totalorder %s20, 0
    %p235 = por %p233, %p234
    %p236 = scmp.ne.s32.totalorder %s222, %s223
    %p237 = scmp.eq.s32.totalorder %s21, 1
    %p238 = por %p236, %p237
    %p240 = scmp.ne.s32.totalorder %s223, %s239
    %p241 = scmp.eq.s32.totalorder %s21, 0
    %p242 = por %p240, %p241
    %p243 = scmp.le.s32.totalorder 1, %s15
    %p244 = scmp.lt.s32.totalorder %s15, 3
    %p245 = pnand %p243, %p244
    %p246 = pneg %p245
    // Predicated region
    $region9: #{rcab_ca_pallas.1} parent=5 // pred_check
      _
    $region10: #{rcab_ca_pallas.1} parent=5 // pred_check_branch
      %248 = sbr.rel (%p245) target = $region12
    $region11: #{rcab_ca_pallas.1} parent=5 // pred_region
      %s249 = ssub.s32 %s15, 1
      // Predicated region
      $region13: #{rcab_ca_pallas.1} parent=11 // pred_check
        %p250 = pneg %p62
      $region14: #{rcab_ca_pallas.1} parent=11 // pred_check_branch
        %252 = sbr.rel (%p250) target = $region16
      $region15: #{rcab_ca_pallas.1} parent=11 // pred_region
        _
      $region16: #{rcab_ca_pallas.1} parent=11 // pred_fallthru
        _
      // Predicated region
      $region17: #{rcab_ca_pallas.1} parent=11 // pred_check
        %p253 = pneg %p83
      $region18: #{rcab_ca_pallas.1} parent=11 // pred_check_branch
        %255 = sbr.rel (%p253) target = $region20
      $region19: #{rcab_ca_pallas.1} parent=11 // pred_region
        _
      $region20: #{rcab_ca_pallas.1} parent=11 // pred_fallthru
        _
      // Predicated region
      $region21: #{rcab_ca_pallas.1} parent=11 // pred_check
        %p256 = pneg %p104
      $region22: #{rcab_ca_pallas.1} parent=11 // pred_check_branch
        %258 = sbr.rel (%p256) target = $region24
      $region23: #{rcab_ca_pallas.1} parent=11 // pred_region
        _
      $region24: #{rcab_ca_pallas.1} parent=11 // pred_fallthru
        _
      // Predicated region
      $region25: #{rcab_ca_pallas.1} parent=11 // pred_check
        %p259 = pneg %p125
      $region26: #{rcab_ca_pallas.1} parent=11 // pred_check_branch
        %261 = sbr.rel (%p259) target = $region28
      $region27: #{rcab_ca_pallas.1} parent=11 // pred_region
        _
      $region28: #{rcab_ca_pallas.1} parent=11 // pred_fallthru
        _
      // Predicated region
      $region29: #{rcab_ca_pallas.1} parent=11 // pred_check
        %p262 = pneg %p146
      $region30: #{rcab_ca_pallas.1} parent=11 // pred_check_branch
        %264 = sbr.rel (%p262) target = $region32
      $region31: #{rcab_ca_pallas.1} parent=11 // pred_region
        _
      $region32: #{rcab_ca_pallas.1} parent=11 // pred_fallthru
        _
      // Predicated region
      $region33: #{rcab_ca_pallas.1} parent=11 // pred_check
        %p265 = pneg %p167
      $region34: #{rcab_ca_pallas.1} parent=11 // pred_check_branch
        %267 = sbr.rel (%p265) target = $region36
      $region35: #{rcab_ca_pallas.1} parent=11 // pred_region
        _
      $region36: #{rcab_ca_pallas.1} parent=11 // pred_fallthru
        _
      // Predicated region
      $region37: #{rcab_ca_pallas.1} parent=11 // pred_check
        %p268 = pneg %p188
      $region38: #{rcab_ca_pallas.1} parent=11 // pred_check_branch
        %270 = sbr.rel (%p268) target = $region40
      $region39: #{rcab_ca_pallas.1} parent=11 // pred_region
        _
      $region40: #{rcab_ca_pallas.1} parent=11 // pred_fallthru
        _
      // Predicated region
      $region41: #{rcab_ca_pallas.1} parent=11 // pred_check
        %p271 = pneg %p209
      $region42: #{rcab_ca_pallas.1} parent=11 // pred_check_branch
        %273 = sbr.rel (%p271) target = $region44
      $region43: #{rcab_ca_pallas.1} parent=11 // pred_region
        _
      $region44: #{rcab_ca_pallas.1} parent=11 // pred_fallthru
        _
    $region12: #{rcab_ca_pallas.1} parent=5 // pred_fallthru
      _
    %p274 = scmp.lt.s32.totalorder %s15, 2
    // Predicated region
    $region45: #{rcab_ca_pallas.1} parent=5 // pred_check
      %p275 = pneg %p274
    $region46: #{rcab_ca_pallas.1} parent=5 // pred_check_branch
      %277 = sbr.rel (%p275) target = $region48
    $region47: #{rcab_ca_pallas.1} parent=5 // pred_region
      // Predicated region
      $region49: #{rcab_ca_pallas.1} parent=47 // pred_check
        %p278 = pneg %p35
      $region50: #{rcab_ca_pallas.1} parent=47 // pred_check_branch
        %280 = sbr.rel (%p278) target = $region52
      $region51: #{rcab_ca_pallas.1} parent=47 // pred_region
        %p281 = scmp.lt.s32.totalorder %s15, 1
        %s282 = scalar_select %p281, %s15, 1
        %s283 = smul.addr %s282, 4
        %s284 = smul.addr %s283, 8
        %s285 = scalar_lea.vmem %s0, %s284
      $region52: #{rcab_ca_pallas.1} parent=47 // pred_fallthru
        _
    $region48: #{rcab_ca_pallas.1} parent=5 // pred_fallthru
      _
    %p286 = scmp.le.s32.totalorder 1, %s15
    %p287 = scmp.lt.s32.totalorder %s15, 3
    %p288 = pnand %p286, %p287
    %p289 = pneg %p288
    // Predicated region
    $region53: #{rcab_ca_pallas.1} parent=5 // pred_check
      _
    $region54: #{rcab_ca_pallas.1} parent=5 // pred_check_branch
      %291 = sbr.rel (%p288) target = $region56
    $region55: #{rcab_ca_pallas.1} parent=5 // pred_region
      %s292 = ssub.s32 %s15, 1
      %p293 = scmp.lt.s32.totalorder %s20, 1
      %s294 = scalar_select %p293, %s20, 1
      %s295 = smul.addr %s294, 4
      %s296 = smul.addr %s295, 8
      %s297 = scalar_lea.vmem %s0, %s296
      %p298 = pneg %p41
      %p299 = pneg %p38
      %p300 = pneg %p62
      %p301 = pneg %p59
      %p302 = pneg %p83
      %p303 = pneg %p80
      %p304 = pneg %p104
      %p305 = pneg %p101
      %p306 = pneg %p125
      %p307 = pneg %p122
      %p308 = pneg %p146
      %p309 = pneg %p143
      %p310 = pneg %p167
      %p311 = pneg %p164
      %p312 = pneg %p188
      %p313 = pneg %p185
      %p314 = pneg %p209
      %p315 = pneg %p206
      %p316 = pneg %p235
      %p317 = pneg %p232
      %p318 = scmp.lt.s32.totalorder %s20, 1
      %s319 = scalar_select %p318, %s20, 1
      %s320 = smul.addr %s319, 4
      %s321 = smul.addr %s320, 8
      %s322 = scalar_lea.vmem %s9, %s321
      %p323 = scmp.lt.s32.totalorder %s20, 1
      %s324 = scalar_select %p323, %s20, 1
      %s325 = smul.addr %s324, 4
      %s326 = smul.addr %s325, 8
      %s327 = scalar_lea.vmem %s0, %s326
      %p328 = scmp.lt.s32.totalorder %s20, 1
      %s329 = scalar_select %p328, %s20, 1
      %s330 = smul.addr %s329, 4
      %s331 = smul.addr %s330, 8
      %s332 = scalar_lea.vmem %s9, %s331
      %v333 = vld [vmem:[%s327] sm:$0xff]
      %v334 = vld [vmem:[%s327 + $0x8] sm:$0xff]
      %v335 = vld [vmem:[%s327 + $0x10] sm:$0xff]
      %v336 = vld [vmem:[%s327 + $0x18] sm:$0xff]
      %vm341 = vcmask 1040384
      %v342 = vrot.slane %v333, 7
      %v343 = vrot.slane %v334, 7
      %v344 = vrot.slane %v335, 7
      %v345 = vsel %vm341, %v342, %v344
      %v346 = vrot.slane %v336, 7
      %v347 = vsel %vm341, %v343, %v346
      %v352 = vsel %vm341, 0.0, %v342
      %v353 = vsel %vm341, 0.0, %v343
      %vm354 = vcmask 1046528
      %v355 = vrot.slane %v333, 1
      %v356 = vrot.slane %v335, 1
      %v357 = vsel %vm354, %v355, %v356
      %v358 = vrot.slane %v334, 1
      %v359 = vrot.slane %v336, 1
      %v360 = vsel %vm354, %v358, %v359
      %v365 = vsel %vm354, %v356, 0.0
      %v366 = vsel %vm354, %v359, 0.0
      %v367 = vld [vmem:[%s1] sm:$0xff]
      %v368 = vld [vmem:[%s1 + $0x8] sm:$0xff]
      %v369 = vld [vmem:[%s1 + $0x10] sm:$0xff]
      %v370 = vld [vmem:[%s1 + $0x18] sm:$0xff]
      %v371 = vld [vmem:[%s1 + $0x20] sm:$0xff]
      %v372 = vld [vmem:[%s1 + $0x28] sm:$0xff]
      %v373 = vld [vmem:[%s1 + $0x30] sm:$0xff]
      %v374 = vld [vmem:[%s1 + $0x38] sm:$0xff]
      %v375 = vld [vmem:[%s1 + $0x40] sm:$0xff]
      %v376 = vld [vmem:[%s1 + $0x48] sm:$0xff]
      %v377 = vld [vmem:[%s1 + $0x50] sm:$0xff]
      %v378 = vld [vmem:[%s1 + $0x58] sm:$0xff]
      %v379 = vld [vmem:[%s1 + $0x60] sm:$0xff]
      %v380 = vld [vmem:[%s1 + $0x68] sm:$0xff]
      %v381 = vld [vmem:[%s1 + $0x70] sm:$0xff]
      %v382 = vld [vmem:[%s1 + $0x78] sm:$0xff]
      %v383 = vld [vmem:[%s1 + $0x80] sm:$0xff]
      %v384 = vld [vmem:[%s1 + $0x88] sm:$0xff]
      %v385 = vld [vmem:[%s1 + $0x90] sm:$0xff]
      %v386 = vld [vmem:[%s1 + $0x98] sm:$0xff]
      %v387 = vld [vmem:[%s1 + $0xa0] sm:$0xff]
      %v388 = vld [vmem:[%s1 + $0xa8] sm:$0xff]
      %v389 = vld [vmem:[%s1 + $0xb0] sm:$0xff]
      %v390 = vld [vmem:[%s1 + $0xb8] sm:$0xff]
      %v391 = vld [vmem:[%s1 + $0xc0] sm:$0xff]
      %v392 = vld [vmem:[%s1 + $0xc8] sm:$0xff]
      %v393 = vld [vmem:[%s1 + $0xd0] sm:$0xff]
      %v394 = vld [vmem:[%s1 + $0xd8] sm:$0xff]
      %v395 = vld [vmem:[%s1 + $0xe0] sm:$0xff]
      %v396 = vld [vmem:[%s1 + $0xe8] sm:$0xff]
      %v397 = vld [vmem:[%s1 + $0xf0] sm:$0xff]
      %v398 = vld [vmem:[%s1 + $0xf8] sm:$0xff]
      %v399 = vld [vmem:[%s1 + $0x100] sm:$0xff]
      %v400 = vld [vmem:[%s1 + $0x108] sm:$0xff]
      %v401 = vld [vmem:[%s1 + $0x110] sm:$0xff]
      %v402 = vld [vmem:[%s1 + $0x118] sm:$0xff]
      %v403 = vld [vmem:[%s1 + $0x120] sm:$0xff]
      %v404 = vld [vmem:[%s1 + $0x128] sm:$0xff]
      %v405 = vld [vmem:[%s1 + $0x130] sm:$0xff]
      %v406 = vld [vmem:[%s1 + $0x138] sm:$0xff]
      %v407 = vld [vmem:[%s1 + $0x140] sm:$0xff]
      %v408 = vld [vmem:[%s1 + $0x148] sm:$0xff]
      %v409 = vld [vmem:[%s1 + $0x150] sm:$0xff]
      %v410 = vld [vmem:[%s1 + $0x158] sm:$0xff]
      %v411 = vld [vmem:[%s1 + $0x160] sm:$0xff]
      %v412 = vld [vmem:[%s1 + $0x168] sm:$0xff]
      %v413 = vld [vmem:[%s1 + $0x170] sm:$0xff]
      %v414 = vld [vmem:[%s1 + $0x178] sm:$0xff]
      %v415 = vld [vmem:[%s1 + $0x180] sm:$0xff]
      %v416 = vld [vmem:[%s1 + $0x188] sm:$0xff]
      %v417 = vld [vmem:[%s1 + $0x190] sm:$0xff]
      %v418 = vld [vmem:[%s1 + $0x198] sm:$0xff]
      %v419 = vld [vmem:[%s1 + $0x1a0] sm:$0xff]
      %v420 = vld [vmem:[%s1 + $0x1a8] sm:$0xff]
      %v421 = vld [vmem:[%s1 + $0x1b0] sm:$0xff]
      %v422 = vld [vmem:[%s1 + $0x1b8] sm:$0xff]
      %v423 = vld [vmem:[%s1 + $0x1c0] sm:$0xff]
      %v424 = vld [vmem:[%s1 + $0x1c8] sm:$0xff]
      %v425 = vld [vmem:[%s1 + $0x1d0] sm:$0xff]
      %v426 = vld [vmem:[%s1 + $0x1d8] sm:$0xff]
      %v427 = vld [vmem:[%s1 + $0x1e0] sm:$0xff]
      %v428 = vld [vmem:[%s1 + $0x1e8] sm:$0xff]
      %v429 = vld [vmem:[%s1 + $0x1f0] sm:$0xff]
      %v430 = vld [vmem:[%s1 + $0x1f8] sm:$0xff]
      %s431 = scalar_lea.vmem %s1, 512
      %v432 = vld [vmem:[%s431] sm:$0xff]
      %v433 = vld [vmem:[%s431 + $0x8] sm:$0xff]
      %v434 = vld [vmem:[%s431 + $0x10] sm:$0xff]
      %v435 = vld [vmem:[%s431 + $0x18] sm:$0xff]
      %v436 = vld [vmem:[%s431 + $0x20] sm:$0xff]
      %v437 = vld [vmem:[%s431 + $0x28] sm:$0xff]
      %v438 = vld [vmem:[%s431 + $0x30] sm:$0xff]
      %v439 = vld [vmem:[%s431 + $0x38] sm:$0xff]
      %v440 = vld [vmem:[%s431 + $0x40] sm:$0xff]
      %v441 = vld [vmem:[%s431 + $0x48] sm:$0xff]
      %v442 = vld [vmem:[%s431 + $0x50] sm:$0xff]
      %v443 = vld [vmem:[%s431 + $0x58] sm:$0xff]
      %v444 = vld [vmem:[%s431 + $0x60] sm:$0xff]
      %v445 = vld [vmem:[%s431 + $0x68] sm:$0xff]
      %v446 = vld [vmem:[%s431 + $0x70] sm:$0xff]
      %v447 = vld [vmem:[%s431 + $0x78] sm:$0xff]
      %v448 = vld [vmem:[%s431 + $0x80] sm:$0xff]
      %v449 = vld [vmem:[%s431 + $0x88] sm:$0xff]
      %v450 = vld [vmem:[%s431 + $0x90] sm:$0xff]
      %v451 = vld [vmem:[%s431 + $0x98] sm:$0xff]
      %v452 = vld [vmem:[%s431 + $0xa0] sm:$0xff]
      %v453 = vld [vmem:[%s431 + $0xa8] sm:$0xff]
      %v454 = vld [vmem:[%s431 + $0xb0] sm:$0xff]
      %v455 = vld [vmem:[%s431 + $0xb8] sm:$0xff]
      %v456 = vld [vmem:[%s431 + $0xc0] sm:$0xff]
      %v457 = vld [vmem:[%s431 + $0xc8] sm:$0xff]
      %v458 = vld [vmem:[%s431 + $0xd0] sm:$0xff]
      %v459 = vld [vmem:[%s431 + $0xd8] sm:$0xff]
      %v460 = vld [vmem:[%s431 + $0xe0] sm:$0xff]
      %v461 = vld [vmem:[%s431 + $0xe8] sm:$0xff]
      %v462 = vld [vmem:[%s431 + $0xf0] sm:$0xff]
      %v463 = vld [vmem:[%s431 + $0xf8] sm:$0xff]
      %v464 = vld [vmem:[%s431 + $0x100] sm:$0xff]
      %v465 = vld [vmem:[%s431 + $0x108] sm:$0xff]
      %v466 = vld [vmem:[%s431 + $0x110] sm:$0xff]
      %v467 = vld [vmem:[%s431 + $0x118] sm:$0xff]
      %v468 = vld [vmem:[%s431 + $0x120] sm:$0xff]
      %v469 = vld [vmem:[%s431 + $0x128] sm:$0xff]
      %v470 = vld [vmem:[%s431 + $0x130] sm:$0xff]
      %v471 = vld [vmem:[%s431 + $0x138] sm:$0xff]
      %v472 = vld [vmem:[%s431 + $0x140] sm:$0xff]
      %v473 = vld [vmem:[%s431 + $0x148] sm:$0xff]
      %v474 = vld [vmem:[%s431 + $0x150] sm:$0xff]
      %v475 = vld [vmem:[%s431 + $0x158] sm:$0xff]
      %v476 = vld [vmem:[%s431 + $0x160] sm:$0xff]
      %v477 = vld [vmem:[%s431 + $0x168] sm:$0xff]
      %v478 = vld [vmem:[%s431 + $0x170] sm:$0xff]
      %v479 = vld [vmem:[%s431 + $0x178] sm:$0xff]
      %v480 = vld [vmem:[%s431 + $0x180] sm:$0xff]
      %v481 = vld [vmem:[%s431 + $0x188] sm:$0xff]
      %v482 = vld [vmem:[%s431 + $0x190] sm:$0xff]
      %v483 = vld [vmem:[%s431 + $0x198] sm:$0xff]
      %v484 = vld [vmem:[%s431 + $0x1a0] sm:$0xff]
      %v485 = vld [vmem:[%s431 + $0x1a8] sm:$0xff]
      %v486 = vld [vmem:[%s431 + $0x1b0] sm:$0xff]
      %v487 = vld [vmem:[%s431 + $0x1b8] sm:$0xff]
      %v488 = vld [vmem:[%s431 + $0x1c0] sm:$0xff]
      %v489 = vld [vmem:[%s431 + $0x1c8] sm:$0xff]
      %v490 = vld [vmem:[%s431 + $0x1d0] sm:$0xff]
      %v491 = vld [vmem:[%s431 + $0x1d8] sm:$0xff]
      %v492 = vld [vmem:[%s431 + $0x1e0] sm:$0xff]
      %v493 = vld [vmem:[%s431 + $0x1e8] sm:$0xff]
      %v494 = vld [vmem:[%s431 + $0x1f0] sm:$0xff]
      %v495 = vld [vmem:[%s431 + $0x1f8] sm:$0xff]
      %496 = vmatprep.subr.mxu0 %v463
      %497 = vmatpush1.msra.mxu0 %v462
      %498 = vmatprep.subr.mxu0 %v461
      %499 = vmatpush1.msra.mxu0 %v460
      %500 = vmatprep.subr.mxu0 %v459
      %501 = vmatpush1.msra.mxu0 %v458
      %502 = vmatprep.subr.mxu0 %v457
      %503 = vmatpush1.msra.mxu0 %v456
      %504 = vmatprep.subr.mxu0 %v455
      %505 = vmatpush1.msra.mxu0 %v454
      %506 = vmatprep.subr.mxu0 %v453
      %507 = vmatpush1.msra.mxu0 %v452
      %508 = vmatprep.subr.mxu0 %v451
      %509 = vmatpush1.msra.mxu0 %v450
      %510 = vmatprep.subr.mxu0 %v449
      %511 = vmatpush1.msra.mxu0 %v448
      %512 = vmatprep.subr.mxu0 %v447
      %513 = vmatpush1.msra.mxu0 %v446
      %514 = vmatprep.subr.mxu0 %v445
      %515 = vmatpush1.msra.mxu0 %v444
      %516 = vmatprep.subr.mxu0 %v443
      %517 = vmatpush1.msra.mxu0 %v442
      %518 = vmatprep.subr.mxu0 %v441
      %519 = vmatpush1.msra.mxu0 %v440
      %520 = vmatprep.subr.mxu0 %v439
      %521 = vmatpush1.msra.mxu0 %v438
      %522 = vmatprep.subr.mxu0 %v437
      %523 = vmatpush1.msra.mxu0 %v436
      %524 = vmatprep.subr.mxu0 %v435
      %525 = vmatpush1.msra.mxu0 %v434
      %526 = vmatprep.subr.mxu0 %v433
      %527 = vmatpush1.msra.mxu0 %v432
      %528 = vmatprep.subr.mxu0 %v495
      %529 = vmatpush2.msra.mxu0 %v494
      %530 = vmatprep.subr.mxu0 %v493
      %531 = vmatpush2.msra.mxu0 %v492
      %532 = vmatprep.subr.mxu0 %v491
      %533 = vmatpush2.msra.mxu0 %v490
      %534 = vmatprep.subr.mxu0 %v489
      %535 = vmatpush2.msra.mxu0 %v488
      %536 = vmatprep.subr.mxu0 %v487
      %537 = vmatpush2.msra.mxu0 %v486
      %538 = vmatprep.subr.mxu0 %v485
      %539 = vmatpush2.msra.mxu0 %v484
      %540 = vmatprep.subr.mxu0 %v483
      %541 = vmatpush2.msra.mxu0 %v482
      %542 = vmatprep.subr.mxu0 %v481
      %543 = vmatpush2.msra.mxu0 %v480
      %544 = vmatprep.subr.mxu0 %v479
      %545 = vmatpush2.msra.mxu0 %v478
      %546 = vmatprep.subr.mxu0 %v477
      %547 = vmatpush2.msra.mxu0 %v476
      %548 = vmatprep.subr.mxu0 %v475
      %549 = vmatpush2.msra.mxu0 %v474
      %550 = vmatprep.subr.mxu0 %v473
      %551 = vmatpush2.msra.mxu0 %v472
      %552 = vmatprep.subr.mxu0 %v471
      %553 = vmatpush2.msra.mxu0 %v470
      %554 = vmatprep.subr.mxu0 %v469
      %555 = vmatpush2.msra.mxu0 %v468
      %556 = vmatprep.subr.mxu0 %v467
      %557 = vmatpush2.msra.mxu0 %v466
      %558 = vmatprep.subr.mxu0 %v465
      %559 = vmatpush2.msra.mxu0 %v464
      %560 = vmatprep.mubr.f32.mxu0 %v334
      %561 = vmatmul.mubr.f32.gmra.mxu0 %v333
      %v562 = vpop.f32.mrf.mxu0
      %v563 = vadd.f32 0.0, %v562
      %v564 = vpop.f32.mrf.mxu0
      %v565 = vadd.f32 0.0, %v564
      %566 = vmatprep.mubr.f32.mxu0 %v336
      %567 = vmatmul.mubr.f32.gmra.mxu0 %v335
      %v568 = vpop.f32.mrf.mxu0
      %v569 = vadd.f32 0.0, %v568
      %v570 = vpop.f32.mrf.mxu0
      %v571 = vadd.f32 0.0, %v570
      %572 = vdwg.mxu0
      %573 = vmatprep.subr.mxu0 %v398
      %574 = vmatpush1.msra.mxu0 %v397
      %575 = vmatprep.subr.mxu0 %v396
      %576 = vmatpush1.msra.mxu0 %v395
      %577 = vmatprep.subr.mxu0 %v394
      %578 = vmatpush1.msra.mxu0 %v393
      %579 = vmatprep.subr.mxu0 %v392
      %580 = vmatpush1.msra.mxu0 %v391
      %581 = vmatprep.subr.mxu0 %v390
      %582 = vmatpush1.msra.mxu0 %v389
      %583 = vmatprep.subr.mxu0 %v388
      %584 = vmatpush1.msra.mxu0 %v387
      %585 = vmatprep.subr.mxu0 %v386
      %586 = vmatpush1.msra.mxu0 %v385
      %587 = vmatprep.subr.mxu0 %v384
      %588 = vmatpush1.msra.mxu0 %v383
      %589 = vmatprep.subr.mxu0 %v382
      %590 = vmatpush1.msra.mxu0 %v381
      %591 = vmatprep.subr.mxu0 %v380
      %592 = vmatpush1.msra.mxu0 %v379
      %593 = vmatprep.subr.mxu0 %v378
      %594 = vmatpush1.msra.mxu0 %v377
      %595 = vmatprep.subr.mxu0 %v376
      %596 = vmatpush1.msra.mxu0 %v375
      %597 = vmatprep.subr.mxu0 %v374
      %598 = vmatpush1.msra.mxu0 %v373
      %599 = vmatprep.subr.mxu0 %v372
      %600 = vmatpush1.msra.mxu0 %v371
      %601 = vmatprep.subr.mxu0 %v370
      %602 = vmatpush1.msra.mxu0 %v369
      %603 = vmatprep.subr.mxu0 %v368
      %604 = vmatpush1.msra.mxu0 %v367
      %605 = vmatprep.subr.mxu0 %v430
      %606 = vmatpush2.msra.mxu0 %v429
      %607 = vmatprep.subr.mxu0 %v428
      %608 = vmatpush2.msra.mxu0 %v427
      %609 = vmatprep.subr.mxu0 %v426
      %610 = vmatpush2.msra.mxu0 %v425
      %611 = vmatprep.subr.mxu0 %v424
      %612 = vmatpush2.msra.mxu0 %v423
      %613 = vmatprep.subr.mxu0 %v422
      %614 = vmatpush2.msra.mxu0 %v421
      %615 = vmatprep.subr.mxu0 %v420
      %616 = vmatpush2.msra.mxu0 %v419
      %617 = vmatprep.subr.mxu0 %v418
      %618 = vmatpush2.msra.mxu0 %v417
      %619 = vmatprep.subr.mxu0 %v416
      %620 = vmatpush2.msra.mxu0 %v415
      %621 = vmatprep.subr.mxu0 %v414
      %622 = vmatpush2.msra.mxu0 %v413
      %623 = vmatprep.subr.mxu0 %v412
      %624 = vmatpush2.msra.mxu0 %v411
      %625 = vmatprep.subr.mxu0 %v410
      %626 = vmatpush2.msra.mxu0 %v409
      %627 = vmatprep.subr.mxu0 %v408
      %628 = vmatpush2.msra.mxu0 %v407
      %629 = vmatprep.subr.mxu0 %v406
      %630 = vmatpush2.msra.mxu0 %v405
      %631 = vmatprep.subr.mxu0 %v404
      %632 = vmatpush2.msra.mxu0 %v403
      %633 = vmatprep.subr.mxu0 %v402
      %634 = vmatpush2.msra.mxu0 %v401
      %635 = vmatprep.subr.mxu0 %v400
      %636 = vmatpush2.msra.mxu0 %v399
      %637 = vmatprep.mubr.f32.mxu0 %v353
      %638 = vmatmul.mubr.f32.gmra.mxu0 %v352
      %v639 = vpop.f32.mrf.mxu0
      %v640 = vadd.f32 %v563, %v639
      %v641 = vpop.f32.mrf.mxu0
      %v642 = vadd.f32 %v565, %v641
      %643 = vmatprep.mubr.f32.mxu0 %v347
      %644 = vmatmul.mubr.f32.gmra.mxu0 %v345
      %v645 = vpop.f32.mrf.mxu0
      %v646 = vadd.f32 %v569, %v645
      %v647 = vpop.f32.mrf.mxu0
      %v648 = vadd.f32 %v571, %v647
      %649 = vdwg.mxu0
      %s650 = scalar_lea.vmem %s1, 1024
      %v651 = vld [vmem:[%s650] sm:$0xff]
      %v652 = vld [vmem:[%s650 + $0x8] sm:$0xff]
      %v653 = vld [vmem:[%s650 + $0x10] sm:$0xff]
      %v654 = vld [vmem:[%s650 + $0x18] sm:$0xff]
      %v655 = vld [vmem:[%s650 + $0x20] sm:$0xff]
      %v656 = vld [vmem:[%s650 + $0x28] sm:$0xff]
      %v657 = vld [vmem:[%s650 + $0x30] sm:$0xff]
      %v658 = vld [vmem:[%s650 + $0x38] sm:$0xff]
      %v659 = vld [vmem:[%s650 + $0x40] sm:$0xff]
      %v660 = vld [vmem:[%s650 + $0x48] sm:$0xff]
      %v661 = vld [vmem:[%s650 + $0x50] sm:$0xff]
      %v662 = vld [vmem:[%s650 + $0x58] sm:$0xff]
      %v663 = vld [vmem:[%s650 + $0x60] sm:$0xff]
      %v664 = vld [vmem:[%s650 + $0x68] sm:$0xff]
      %v665 = vld [vmem:[%s650 + $0x70] sm:$0xff]
      %v666 = vld [vmem:[%s650 + $0x78] sm:$0xff]
      %v667 = vld [vmem:[%s650 + $0x80] sm:$0xff]
      %v668 = vld [vmem:[%s650 + $0x88] sm:$0xff]
      %v669 = vld [vmem:[%s650 + $0x90] sm:$0xff]
      %v670 = vld [vmem:[%s650 + $0x98] sm:$0xff]
      %v671 = vld [vmem:[%s650 + $0xa0] sm:$0xff]
      %v672 = vld [vmem:[%s650 + $0xa8] sm:$0xff]
      %v673 = vld [vmem:[%s650 + $0xb0] sm:$0xff]
      %v674 = vld [vmem:[%s650 + $0xb8] sm:$0xff]
      %v675 = vld [vmem:[%s650 + $0xc0] sm:$0xff]
      %v676 = vld [vmem:[%s650 + $0xc8] sm:$0xff]
      %v677 = vld [vmem:[%s650 + $0xd0] sm:$0xff]
      %v678 = vld [vmem:[%s650 + $0xd8] sm:$0xff]
      %v679 = vld [vmem:[%s650 + $0xe0] sm:$0xff]
      %v680 = vld [vmem:[%s650 + $0xe8] sm:$0xff]
      %v681 = vld [vmem:[%s650 + $0xf0] sm:$0xff]
      %v682 = vld [vmem:[%s650 + $0xf8] sm:$0xff]
      %v683 = vld [vmem:[%s650 + $0x100] sm:$0xff]
      %v684 = vld [vmem:[%s650 + $0x108] sm:$0xff]
      %v685 = vld [vmem:[%s650 + $0x110] sm:$0xff]
      %v686 = vld [vmem:[%s650 + $0x118] sm:$0xff]
      %v687 = vld [vmem:[%s650 + $0x120] sm:$0xff]
      %v688 = vld [vmem:[%s650 + $0x128] sm:$0xff]
      %v689 = vld [vmem:[%s650 + $0x130] sm:$0xff]
      %v690 = vld [vmem:[%s650 + $0x138] sm:$0xff]
      %v691 = vld [vmem:[%s650 + $0x140] sm:$0xff]
      %v692 = vld [vmem:[%s650 + $0x148] sm:$0xff]
      %v693 = vld [vmem:[%s650 + $0x150] sm:$0xff]
      %v694 = vld [vmem:[%s650 + $0x158] sm:$0xff]
      %v695 = vld [vmem:[%s650 + $0x160] sm:$0xff]
      %v696 = vld [vmem:[%s650 + $0x168] sm:$0xff]
      %v697 = vld [vmem:[%s650 + $0x170] sm:$0xff]
      %v698 = vld [vmem:[%s650 + $0x178] sm:$0xff]
      %v699 = vld [vmem:[%s650 + $0x180] sm:$0xff]
      %v700 = vld [vmem:[%s650 + $0x188] sm:$0xff]
      %v701 = vld [vmem:[%s650 + $0x190] sm:$0xff]
      %v702 = vld [vmem:[%s650 + $0x198] sm:$0xff]
      %v703 = vld [vmem:[%s650 + $0x1a0] sm:$0xff]
      %v704 = vld [vmem:[%s650 + $0x1a8] sm:$0xff]
      %v705 = vld [vmem:[%s650 + $0x1b0] sm:$0xff]
      %v706 = vld [vmem:[%s650 + $0x1b8] sm:$0xff]
      %v707 = vld [vmem:[%s650 + $0x1c0] sm:$0xff]
      %v708 = vld [vmem:[%s650 + $0x1c8] sm:$0xff]
      %v709 = vld [vmem:[%s650 + $0x1d0] sm:$0xff]
      %v710 = vld [vmem:[%s650 + $0x1d8] sm:$0xff]
      %v711 = vld [vmem:[%s650 + $0x1e0] sm:$0xff]
      %v712 = vld [vmem:[%s650 + $0x1e8] sm:$0xff]
      %v713 = vld [vmem:[%s650 + $0x1f0] sm:$0xff]
      %v714 = vld [vmem:[%s650 + $0x1f8] sm:$0xff]
      %715 = vmatprep.subr.mxu0 %v682
      %716 = vmatpush1.msra.mxu0 %v681
      %717 = vmatprep.subr.mxu0 %v680
      %718 = vmatpush1.msra.mxu0 %v679
      %719 = vmatprep.subr.mxu0 %v678
      %720 = vmatpush1.msra.mxu0 %v677
      %721 = vmatprep.subr.mxu0 %v676
      %722 = vmatpush1.msra.mxu0 %v675
      %723 = vmatprep.subr.mxu0 %v674
      %724 = vmatpush1.msra.mxu0 %v673
      %725 = vmatprep.subr.mxu0 %v672
      %726 = vmatpush1.msra.mxu0 %v671
      %727 = vmatprep.subr.mxu0 %v670
      %728 = vmatpush1.msra.mxu0 %v669
      %729 = vmatprep.subr.mxu0 %v668
      %730 = vmatpush1.msra.mxu0 %v667
      %731 = vmatprep.subr.mxu0 %v666
      %732 = vmatpush1.msra.mxu0 %v665
      %733 = vmatprep.subr.mxu0 %v664
      %734 = vmatpush1.msra.mxu0 %v663
      %735 = vmatprep.subr.mxu0 %v662
      %736 = vmatpush1.msra.mxu0 %v661
      %737 = vmatprep.subr.mxu0 %v660
      %738 = vmatpush1.msra.mxu0 %v659
      %739 = vmatprep.subr.mxu0 %v658
      %740 = vmatpush1.msra.mxu0 %v657
      %741 = vmatprep.subr.mxu0 %v656
      %742 = vmatpush1.msra.mxu0 %v655
      %743 = vmatprep.subr.mxu0 %v654
      %744 = vmatpush1.msra.mxu0 %v653
      %745 = vmatprep.subr.mxu0 %v652
      %746 = vmatpush1.msra.mxu0 %v651
      %747 = vmatprep.subr.mxu0 %v714
      %748 = vmatpush2.msra.mxu0 %v713
      %749 = vmatprep.subr.mxu0 %v712
      %750 = vmatpush2.msra.mxu0 %v711
      %751 = vmatprep.subr.mxu0 %v710
      %752 = vmatpush2.msra.mxu0 %v709
      %753 = vmatprep.subr.mxu0 %v708
      %754 = vmatpush2.msra.mxu0 %v707
      %755 = vmatprep.subr.mxu0 %v706
      %756 = vmatpush2.msra.mxu0 %v705
      %757 = vmatprep.subr.mxu0 %v704
      %758 = vmatpush2.msra.mxu0 %v703
      %759 = vmatprep.subr.mxu0 %v702
      %760 = vmatpush2.msra.mxu0 %v701
      %761 = vmatprep.subr.mxu0 %v700
      %762 = vmatpush2.msra.mxu0 %v699
      %763 = vmatprep.subr.mxu0 %v698
      %764 = vmatpush2.msra.mxu0 %v697
      %765 = vmatprep.subr.mxu0 %v696
      %766 = vmatpush2.msra.mxu0 %v695
      %767 = vmatprep.subr.mxu0 %v694
      %768 = vmatpush2.msra.mxu0 %v693
      %769 = vmatprep.subr.mxu0 %v692
      %770 = vmatpush2.msra.mxu0 %v691
      %771 = vmatprep.subr.mxu0 %v690
      %772 = vmatpush2.msra.mxu0 %v689
      %773 = vmatprep.subr.mxu0 %v688
      %774 = vmatpush2.msra.mxu0 %v687
      %775 = vmatprep.subr.mxu0 %v686
      %776 = vmatpush2.msra.mxu0 %v685
      %777 = vmatprep.subr.mxu0 %v684
      %778 = vmatpush2.msra.mxu0 %v683
      %779 = vmatprep.mubr.f32.mxu0 %v360
      %780 = vmatmul.mubr.f32.gmra.mxu0 %v357
      %v781 = vpop.f32.mrf.mxu0
      %v782 = vadd.f32 0.0, %v781
      %v783 = vpop.f32.mrf.mxu0
      %v784 = vadd.f32 0.0, %v783
      %785 = vmatprep.mubr.f32.mxu0 %v366
      %786 = vmatmul.mubr.f32.gmra.mxu0 %v365
      %v787 = vpop.f32.mrf.mxu0
      %v788 = vadd.f32 0.0, %v787
      %v789 = vpop.f32.mrf.mxu0
      %v790 = vadd.f32 0.0, %v789
      %791 = vdwg.mxu0
      %v792 = vadd.f32 %v640, %v782
      %v793 = vadd.f32 %v642, %v784
      %v794 = vadd.f32 %v646, %v788
      %v795 = vadd.f32 %v648, %v790
      %v796 = vld [vmem:[%s2] sm:$0x3]
      %v798 = vlaneseq
      %v799 = vshrl.u32 %v798, 7
      %v800 = vsub.s32 0, %v799
      %v801 = vrot.slane %v796, %v800
      %v802 = vlaneseq
      %v803 = vshrl.u32 %v802, 7
      %v804 = vsub.s32 1, %v803
      %v805 = vrot.slane %v796, %v804
      %v808 = vadd.f32 %v792, %v801
      %v809 = vadd.f32 %v793, %v805
      %v810 = vadd.f32 %v794, %v801
      %v811 = vadd.f32 %v795, %v805
      %v812 = vmax.f32 %v808, 0.0
      %v813 = vmax.f32 %v809, 0.0
      %v814 = vmax.f32 %v810, 0.0
      %v815 = vmax.f32 %v811, 0.0
      %v820 = vrot.slane %v812, 7
      %v821 = vrot.slane %v813, 7
      %v822 = vrot.slane %v814, 7
      %v823 = vsel %vm341, %v820, %v822
      %v824 = vrot.slane %v815, 7
      %v825 = vsel %vm341, %v821, %v824
      %v830 = vsel %vm341, 0.0, %v820
      %v831 = vsel %vm341, 0.0, %v821
      %v832 = vrot.slane %v812, 1
      %v833 = vrot.slane %v814, 1
      %v834 = vsel %vm354, %v832, %v833
      %v835 = vrot.slane %v813, 1
      %v836 = vrot.slane %v815, 1
      %v837 = vsel %vm354, %v835, %v836
      %v842 = vsel %vm354, %v833, 0.0
      %v843 = vsel %vm354, %v836, 0.0
      %v844 = vld [vmem:[%s3] sm:$0xff]
      %v845 = vld [vmem:[%s3 + $0x8] sm:$0xff]
      %v846 = vld [vmem:[%s3 + $0x10] sm:$0xff]
      %v847 = vld [vmem:[%s3 + $0x18] sm:$0xff]
      %v848 = vld [vmem:[%s3 + $0x20] sm:$0xff]
      %v849 = vld [vmem:[%s3 + $0x28] sm:$0xff]
      %v850 = vld [vmem:[%s3 + $0x30] sm:$0xff]
      %v851 = vld [vmem:[%s3 + $0x38] sm:$0xff]
      %v852 = vld [vmem:[%s3 + $0x40] sm:$0xff]
      %v853 = vld [vmem:[%s3 + $0x48] sm:$0xff]
      %v854 = vld [vmem:[%s3 + $0x50] sm:$0xff]
      %v855 = vld [vmem:[%s3 + $0x58] sm:$0xff]
      %v856 = vld [vmem:[%s3 + $0x60] sm:$0xff]
      %v857 = vld [vmem:[%s3 + $0x68] sm:$0xff]
      %v858 = vld [vmem:[%s3 + $0x70] sm:$0xff]
      %v859 = vld [vmem:[%s3 + $0x78] sm:$0xff]
      %v860 = vld [vmem:[%s3 + $0x80] sm:$0xff]
      %v861 = vld [vmem:[%s3 + $0x88] sm:$0xff]
      %v862 = vld [vmem:[%s3 + $0x90] sm:$0xff]
      %v863 = vld [vmem:[%s3 + $0x98] sm:$0xff]
      %v864 = vld [vmem:[%s3 + $0xa0] sm:$0xff]
      %v865 = vld [vmem:[%s3 + $0xa8] sm:$0xff]
      %v866 = vld [vmem:[%s3 + $0xb0] sm:$0xff]
      %v867 = vld [vmem:[%s3 + $0xb8] sm:$0xff]
      %v868 = vld [vmem:[%s3 + $0xc0] sm:$0xff]
      %v869 = vld [vmem:[%s3 + $0xc8] sm:$0xff]
      %v870 = vld [vmem:[%s3 + $0xd0] sm:$0xff]
      %v871 = vld [vmem:[%s3 + $0xd8] sm:$0xff]
      %v872 = vld [vmem:[%s3 + $0xe0] sm:$0xff]
      %v873 = vld [vmem:[%s3 + $0xe8] sm:$0xff]
      %v874 = vld [vmem:[%s3 + $0xf0] sm:$0xff]
      %v875 = vld [vmem:[%s3 + $0xf8] sm:$0xff]
      %v876 = vld [vmem:[%s3 + $0x100] sm:$0xff]
      %v877 = vld [vmem:[%s3 + $0x108] sm:$0xff]
      %v878 = vld [vmem:[%s3 + $0x110] sm:$0xff]
      %v879 = vld [vmem:[%s3 + $0x118] sm:$0xff]
      %v880 = vld [vmem:[%s3 + $0x120] sm:$0xff]
      %v881 = vld [vmem:[%s3 + $0x128] sm:$0xff]
      %v882 = vld [vmem:[%s3 + $0x130] sm:$0xff]
      %v883 = vld [vmem:[%s3 + $0x138] sm:$0xff]
      %v884 = vld [vmem:[%s3 + $0x140] sm:$0xff]
      %v885 = vld [vmem:[%s3 + $0x148] sm:$0xff]
      %v886 = vld [vmem:[%s3 + $0x150] sm:$0xff]
      %v887 = vld [vmem:[%s3 + $0x158] sm:$0xff]
      %v888 = vld [vmem:[%s3 + $0x160] sm:$0xff]
      %v889 = vld [vmem:[%s3 + $0x168] sm:$0xff]
      %v890 = vld [vmem:[%s3 + $0x170] sm:$0xff]
      %v891 = vld [vmem:[%s3 + $0x178] sm:$0xff]
      %v892 = vld [vmem:[%s3 + $0x180] sm:$0xff]
      %v893 = vld [vmem:[%s3 + $0x188] sm:$0xff]
      %v894 = vld [vmem:[%s3 + $0x190] sm:$0xff]
      %v895 = vld [vmem:[%s3 + $0x198] sm:$0xff]
      %v896 = vld [vmem:[%s3 + $0x1a0] sm:$0xff]
      %v897 = vld [vmem:[%s3 + $0x1a8] sm:$0xff]
      %v898 = vld [vmem:[%s3 + $0x1b0] sm:$0xff]
      %v899 = vld [vmem:[%s3 + $0x1b8] sm:$0xff]
      %v900 = vld [vmem:[%s3 + $0x1c0] sm:$0xff]
      %v901 = vld [vmem:[%s3 + $0x1c8] sm:$0xff]
      %v902 = vld [vmem:[%s3 + $0x1d0] sm:$0xff]
      %v903 = vld [vmem:[%s3 + $0x1d8] sm:$0xff]
      %v904 = vld [vmem:[%s3 + $0x1e0] sm:$0xff]
      %v905 = vld [vmem:[%s3 + $0x1e8] sm:$0xff]
      %v906 = vld [vmem:[%s3 + $0x1f0] sm:$0xff]
      %v907 = vld [vmem:[%s3 + $0x1f8] sm:$0xff]
      %s908 = scalar_lea.vmem %s3, 512
      %v909 = vld [vmem:[%s908] sm:$0xff]
      %v910 = vld [vmem:[%s908 + $0x8] sm:$0xff]
      %v911 = vld [vmem:[%s908 + $0x10] sm:$0xff]
      %v912 = vld [vmem:[%s908 + $0x18] sm:$0xff]
      %v913 = vld [vmem:[%s908 + $0x20] sm:$0xff]
      %v914 = vld [vmem:[%s908 + $0x28] sm:$0xff]
      %v915 = vld [vmem:[%s908 + $0x30] sm:$0xff]
      %v916 = vld [vmem:[%s908 + $0x38] sm:$0xff]
      %v917 = vld [vmem:[%s908 + $0x40] sm:$0xff]
      %v918 = vld [vmem:[%s908 + $0x48] sm:$0xff]
      %v919 = vld [vmem:[%s908 + $0x50] sm:$0xff]
      %v920 = vld [vmem:[%s908 + $0x58] sm:$0xff]
      %v921 = vld [vmem:[%s908 + $0x60] sm:$0xff]
      %v922 = vld [vmem:[%s908 + $0x68] sm:$0xff]
      %v923 = vld [vmem:[%s908 + $0x70] sm:$0xff]
      %v924 = vld [vmem:[%s908 + $0x78] sm:$0xff]
      %v925 = vld [vmem:[%s908 + $0x80] sm:$0xff]
      %v926 = vld [vmem:[%s908 + $0x88] sm:$0xff]
      %v927 = vld [vmem:[%s908 + $0x90] sm:$0xff]
      %v928 = vld [vmem:[%s908 + $0x98] sm:$0xff]
      %v929 = vld [vmem:[%s908 + $0xa0] sm:$0xff]
      %v930 = vld [vmem:[%s908 + $0xa8] sm:$0xff]
      %v931 = vld [vmem:[%s908 + $0xb0] sm:$0xff]
      %v932 = vld [vmem:[%s908 + $0xb8] sm:$0xff]
      %v933 = vld [vmem:[%s908 + $0xc0] sm:$0xff]
      %v934 = vld [vmem:[%s908 + $0xc8] sm:$0xff]
      %v935 = vld [vmem:[%s908 + $0xd0] sm:$0xff]
      %v936 = vld [vmem:[%s908 + $0xd8] sm:$0xff]
      %v937 = vld [vmem:[%s908 + $0xe0] sm:$0xff]
      %v938 = vld [vmem:[%s908 + $0xe8] sm:$0xff]
      %v939 = vld [vmem:[%s908 + $0xf0] sm:$0xff]
      %v940 = vld [vmem:[%s908 + $0xf8] sm:$0xff]
      %v941 = vld [vmem:[%s908 + $0x100] sm:$0xff]
      %v942 = vld [vmem:[%s908 + $0x108] sm:$0xff]
      %v943 = vld [vmem:[%s908 + $0x110] sm:$0xff]
      %v944 = vld [vmem:[%s908 + $0x118] sm:$0xff]
      %v945 = vld [vmem:[%s908 + $0x120] sm:$0xff]
      %v946 = vld [vmem:[%s908 + $0x128] sm:$0xff]
      %v947 = vld [vmem:[%s908 + $0x130] sm:$0xff]
      %v948 = vld [vmem:[%s908 + $0x138] sm:$0xff]
      %v949 = vld [vmem:[%s908 + $0x140] sm:$0xff]
      %v950 = vld [vmem:[%s908 + $0x148] sm:$0xff]
      %v951 = vld [vmem:[%s908 + $0x150] sm:$0xff]
      %v952 = vld [vmem:[%s908 + $0x158] sm:$0xff]
      %v953 = vld [vmem:[%s908 + $0x160] sm:$0xff]
      %v954 = vld [vmem:[%s908 + $0x168] sm:$0xff]
      %v955 = vld [vmem:[%s908 + $0x170] sm:$0xff]
      %v956 = vld [vmem:[%s908 + $0x178] sm:$0xff]
      %v957 = vld [vmem:[%s908 + $0x180] sm:$0xff]
      %v958 = vld [vmem:[%s908 + $0x188] sm:$0xff]
      %v959 = vld [vmem:[%s908 + $0x190] sm:$0xff]
      %v960 = vld [vmem:[%s908 + $0x198] sm:$0xff]
      %v961 = vld [vmem:[%s908 + $0x1a0] sm:$0xff]
      %v962 = vld [vmem:[%s908 + $0x1a8] sm:$0xff]
      %v963 = vld [vmem:[%s908 + $0x1b0] sm:$0xff]
      %v964 = vld [vmem:[%s908 + $0x1b8] sm:$0xff]
      %v965 = vld [vmem:[%s908 + $0x1c0] sm:$0xff]
      %v966 = vld [vmem:[%s908 + $0x1c8] sm:$0xff]
      %v967 = vld [vmem:[%s908 + $0x1d0] sm:$0xff]
      %v968 = vld [vmem:[%s908 + $0x1d8] sm:$0xff]
      %v969 = vld [vmem:[%s908 + $0x1e0] sm:$0xff]
      %v970 = vld [vmem:[%s908 + $0x1e8] sm:$0xff]
      %v971 = vld [vmem:[%s908 + $0x1f0] sm:$0xff]
      %v972 = vld [vmem:[%s908 + $0x1f8] sm:$0xff]
      %973 = vmatprep.subr.mxu0 %v940
      %974 = vmatpush1.msra.mxu0 %v939
      %975 = vmatprep.subr.mxu0 %v938
      %976 = vmatpush1.msra.mxu0 %v937
      %977 = vmatprep.subr.mxu0 %v936
      %978 = vmatpush1.msra.mxu0 %v935
      %979 = vmatprep.subr.mxu0 %v934
      %980 = vmatpush1.msra.mxu0 %v933
      %981 = vmatprep.subr.mxu0 %v932
      %982 = vmatpush1.msra.mxu0 %v931
      %983 = vmatprep.subr.mxu0 %v930
      %984 = vmatpush1.msra.mxu0 %v929
      %985 = vmatprep.subr.mxu0 %v928
      %986 = vmatpush1.msra.mxu0 %v927
      %987 = vmatprep.subr.mxu0 %v926
      %988 = vmatpush1.msra.mxu0 %v925
      %989 = vmatprep.subr.mxu0 %v924
      %990 = vmatpush1.msra.mxu0 %v923
      %991 = vmatprep.subr.mxu0 %v922
      %992 = vmatpush1.msra.mxu0 %v921
      %993 = vmatprep.subr.mxu0 %v920
      %994 = vmatpush1.msra.mxu0 %v919
      %995 = vmatprep.subr.mxu0 %v918
      %996 = vmatpush1.msra.mxu0 %v917
      %997 = vmatprep.subr.mxu0 %v916
      %998 = vmatpush1.msra.mxu0 %v915
      %999 = vmatprep.subr.mxu0 %v914
      %1000 = vmatpush1.msra.mxu0 %v913
      %1001 = vmatprep.subr.mxu0 %v912
      %1002 = vmatpush1.msra.mxu0 %v911
      %1003 = vmatprep.subr.mxu0 %v910
      %1004 = vmatpush1.msra.mxu0 %v909
      %1005 = vmatprep.subr.mxu0 %v972
      %1006 = vmatpush2.msra.mxu0 %v971
      %1007 = vmatprep.subr.mxu0 %v970
      %1008 = vmatpush2.msra.mxu0 %v969
      %1009 = vmatprep.subr.mxu0 %v968
      %1010 = vmatpush2.msra.mxu0 %v967
      %1011 = vmatprep.subr.mxu0 %v966
      %1012 = vmatpush2.msra.mxu0 %v965
      %1013 = vmatprep.subr.mxu0 %v964
      %1014 = vmatpush2.msra.mxu0 %v963
      %1015 = vmatprep.subr.mxu0 %v962
      %1016 = vmatpush2.msra.mxu0 %v961
      %1017 = vmatprep.subr.mxu0 %v960
      %1018 = vmatpush2.msra.mxu0 %v959
      %1019 = vmatprep.subr.mxu0 %v958
      %1020 = vmatpush2.msra.mxu0 %v957
      %1021 = vmatprep.subr.mxu0 %v956
      %1022 = vmatpush2.msra.mxu0 %v955
      %1023 = vmatprep.subr.mxu0 %v954
      %1024 = vmatpush2.msra.mxu0 %v953
      %1025 = vmatprep.subr.mxu0 %v952
      %1026 = vmatpush2.msra.mxu0 %v951
      %1027 = vmatprep.subr.mxu0 %v950
      %1028 = vmatpush2.msra.mxu0 %v949
      %1029 = vmatprep.subr.mxu0 %v948
      %1030 = vmatpush2.msra.mxu0 %v947
      %1031 = vmatprep.subr.mxu0 %v946
      %1032 = vmatpush2.msra.mxu0 %v945
      %1033 = vmatprep.subr.mxu0 %v944
      %1034 = vmatpush2.msra.mxu0 %v943
      %1035 = vmatprep.subr.mxu0 %v942
      %1036 = vmatpush2.msra.mxu0 %v941
      %1037 = vmatprep.mubr.f32.mxu0 %v813
      %1038 = vmatmul.mubr.f32.gmra.mxu0 %v812
      %v1039 = vpop.f32.mrf.mxu0
      %v1040 = vadd.f32 0.0, %v1039
      %v1041 = vpop.f32.mrf.mxu0
      %v1042 = vadd.f32 0.0, %v1041
      %1043 = vmatprep.mubr.f32.mxu0 %v815
      %1044 = vmatmul.mubr.f32.gmra.mxu0 %v814
      %v1045 = vpop.f32.mrf.mxu0
      %v1046 = vadd.f32 0.0, %v1045
      %v1047 = vpop.f32.mrf.mxu0
      %v1048 = vadd.f32 0.0, %v1047
      %1049 = vdwg.mxu0
      %1050 = vmatprep.subr.mxu0 %v875
      %1051 = vmatpush1.msra.mxu0 %v874
      %1052 = vmatprep.subr.mxu0 %v873
      %1053 = vmatpush1.msra.mxu0 %v872
      %1054 = vmatprep.subr.mxu0 %v871
      %1055 = vmatpush1.msra.mxu0 %v870
      %1056 = vmatprep.subr.mxu0 %v869
      %1057 = vmatpush1.msra.mxu0 %v868
      %1058 = vmatprep.subr.mxu0 %v867
      %1059 = vmatpush1.msra.mxu0 %v866
      %1060 = vmatprep.subr.mxu0 %v865
      %1061 = vmatpush1.msra.mxu0 %v864
      %1062 = vmatprep.subr.mxu0 %v863
      %1063 = vmatpush1.msra.mxu0 %v862
      %1064 = vmatprep.subr.mxu0 %v861
      %1065 = vmatpush1.msra.mxu0 %v860
      %1066 = vmatprep.subr.mxu0 %v859
      %1067 = vmatpush1.msra.mxu0 %v858
      %1068 = vmatprep.subr.mxu0 %v857
      %1069 = vmatpush1.msra.mxu0 %v856
      %1070 = vmatprep.subr.mxu0 %v855
      %1071 = vmatpush1.msra.mxu0 %v854
      %1072 = vmatprep.subr.mxu0 %v853
      %1073 = vmatpush1.msra.mxu0 %v852
      %1074 = vmatprep.subr.mxu0 %v851
      %1075 = vmatpush1.msra.mxu0 %v850
      %1076 = vmatprep.subr.mxu0 %v849
      %1077 = vmatpush1.msra.mxu0 %v848
      %1078 = vmatprep.subr.mxu0 %v847
      %1079 = vmatpush1.msra.mxu0 %v846
      %1080 = vmatprep.subr.mxu0 %v845
      %1081 = vmatpush1.msra.mxu0 %v844
      %1082 = vmatprep.subr.mxu0 %v907
      %1083 = vmatpush2.msra.mxu0 %v906
      %1084 = vmatprep.subr.mxu0 %v905
      %1085 = vmatpush2.msra.mxu0 %v904
      %1086 = vmatprep.subr.mxu0 %v903
      %1087 = vmatpush2.msra.mxu0 %v902
      %1088 = vmatprep.subr.mxu0 %v901
      %1089 = vmatpush2.msra.mxu0 %v900
      %1090 = vmatprep.subr.mxu0 %v899
      %1091 = vmatpush2.msra.mxu0 %v898
      %1092 = vmatprep.subr.mxu0 %v897
      %1093 = vmatpush2.msra.mxu0 %v896
      %1094 = vmatprep.subr.mxu0 %v895
      %1095 = vmatpush2.msra.mxu0 %v894
      %1096 = vmatprep.subr.mxu0 %v893
      %1097 = vmatpush2.msra.mxu0 %v892
      %1098 = vmatprep.subr.mxu0 %v891
      %1099 = vmatpush2.msra.mxu0 %v890
      %1100 = vmatprep.subr.mxu0 %v889
      %1101 = vmatpush2.msra.mxu0 %v888
      %1102 = vmatprep.subr.mxu0 %v887
      %1103 = vmatpush2.msra.mxu0 %v886
      %1104 = vmatprep.subr.mxu0 %v885
      %1105 = vmatpush2.msra.mxu0 %v884
      %1106 = vmatprep.subr.mxu0 %v883
      %1107 = vmatpush2.msra.mxu0 %v882
      %1108 = vmatprep.subr.mxu0 %v881
      %1109 = vmatpush2.msra.mxu0 %v880
      %1110 = vmatprep.subr.mxu0 %v879
      %1111 = vmatpush2.msra.mxu0 %v878
      %1112 = vmatprep.subr.mxu0 %v877
      %1113 = vmatpush2.msra.mxu0 %v876
      %1114 = vmatprep.mubr.f32.mxu0 %v831
      %1115 = vmatmul.mubr.f32.gmra.mxu0 %v830
      %v1116 = vpop.f32.mrf.mxu0
      %v1117 = vadd.f32 %v1040, %v1116
      %v1118 = vpop.f32.mrf.mxu0
      %v1119 = vadd.f32 %v1042, %v1118
      %1120 = vmatprep.mubr.f32.mxu0 %v825
      %1121 = vmatmul.mubr.f32.gmra.mxu0 %v823
      %v1122 = vpop.f32.mrf.mxu0
      %v1123 = vadd.f32 %v1046, %v1122
      %v1124 = vpop.f32.mrf.mxu0
      %v1125 = vadd.f32 %v1048, %v1124
      %1126 = vdwg.mxu0
      %s1127 = scalar_lea.vmem %s3, 1024
      %v1128 = vld [vmem:[%s1127] sm:$0xff]
      %v1129 = vld [vmem:[%s1127 + $0x8] sm:$0xff]
      %v1130 = vld [vmem:[%s1127 + $0x10] sm:$0xff]
      %v1131 = vld [vmem:[%s1127 + $0x18] sm:$0xff]
      %v1132 = vld [vmem:[%s1127 + $0x20] sm:$0xff]
      %v1133 = vld [vmem:[%s1127 + $0x28] sm:$0xff]
      %v1134 = vld [vmem:[%s1127 + $0x30] sm:$0xff]
      %v1135 = vld [vmem:[%s1127 + $0x38] sm:$0xff]
      %v1136 = vld [vmem:[%s1127 + $0x40] sm:$0xff]
      %v1137 = vld [vmem:[%s1127 + $0x48] sm:$0xff]
      %v1138 = vld [vmem:[%s1127 + $0x50] sm:$0xff]
      %v1139 = vld [vmem:[%s1127 + $0x58] sm:$0xff]
      %v1140 = vld [vmem:[%s1127 + $0x60] sm:$0xff]
      %v1141 = vld [vmem:[%s1127 + $0x68] sm:$0xff]
      %v1142 = vld [vmem:[%s1127 + $0x70] sm:$0xff]
      %v1143 = vld [vmem:[%s1127 + $0x78] sm:$0xff]
      %v1144 = vld [vmem:[%s1127 + $0x80] sm:$0xff]
      %v1145 = vld [vmem:[%s1127 + $0x88] sm:$0xff]
      %v1146 = vld [vmem:[%s1127 + $0x90] sm:$0xff]
      %v1147 = vld [vmem:[%s1127 + $0x98] sm:$0xff]
      %v1148 = vld [vmem:[%s1127 + $0xa0] sm:$0xff]
      %v1149 = vld [vmem:[%s1127 + $0xa8] sm:$0xff]
      %v1150 = vld [vmem:[%s1127 + $0xb0] sm:$0xff]
      %v1151 = vld [vmem:[%s1127 + $0xb8] sm:$0xff]
      %v1152 = vld [vmem:[%s1127 + $0xc0] sm:$0xff]
      %v1153 = vld [vmem:[%s1127 + $0xc8] sm:$0xff]
      %v1154 = vld [vmem:[%s1127 + $0xd0] sm:$0xff]
      %v1155 = vld [vmem:[%s1127 + $0xd8] sm:$0xff]
      %v1156 = vld [vmem:[%s1127 + $0xe0] sm:$0xff]
      %v1157 = vld [vmem:[%s1127 + $0xe8] sm:$0xff]
      %v1158 = vld [vmem:[%s1127 + $0xf0] sm:$0xff]
      %v1159 = vld [vmem:[%s1127 + $0xf8] sm:$0xff]
      %v1160 = vld [vmem:[%s1127 + $0x100] sm:$0xff]
      %v1161 = vld [vmem:[%s1127 + $0x108] sm:$0xff]
      %v1162 = vld [vmem:[%s1127 + $0x110] sm:$0xff]
      %v1163 = vld [vmem:[%s1127 + $0x118] sm:$0xff]
      %v1164 = vld [vmem:[%s1127 + $0x120] sm:$0xff]
      %v1165 = vld [vmem:[%s1127 + $0x128] sm:$0xff]
      %v1166 = vld [vmem:[%s1127 + $0x130] sm:$0xff]
      %v1167 = vld [vmem:[%s1127 + $0x138] sm:$0xff]
      %v1168 = vld [vmem:[%s1127 + $0x140] sm:$0xff]
      %v1169 = vld [vmem:[%s1127 + $0x148] sm:$0xff]
      %v1170 = vld [vmem:[%s1127 + $0x150] sm:$0xff]
      %v1171 = vld [vmem:[%s1127 + $0x158] sm:$0xff]
      %v1172 = vld [vmem:[%s1127 + $0x160] sm:$0xff]
      %v1173 = vld [vmem:[%s1127 + $0x168] sm:$0xff]
      %v1174 = vld [vmem:[%s1127 + $0x170] sm:$0xff]
      %v1175 = vld [vmem:[%s1127 + $0x178] sm:$0xff]
      %v1176 = vld [vmem:[%s1127 + $0x180] sm:$0xff]
      %v1177 = vld [vmem:[%s1127 + $0x188] sm:$0xff]
      %v1178 = vld [vmem:[%s1127 + $0x190] sm:$0xff]
      %v1179 = vld [vmem:[%s1127 + $0x198] sm:$0xff]
      %v1180 = vld [vmem:[%s1127 + $0x1a0] sm:$0xff]
      %v1181 = vld [vmem:[%s1127 + $0x1a8] sm:$0xff]
      %v1182 = vld [vmem:[%s1127 + $0x1b0] sm:$0xff]
      %v1183 = vld [vmem:[%s1127 + $0x1b8] sm:$0xff]
      %v1184 = vld [vmem:[%s1127 + $0x1c0] sm:$0xff]
      %v1185 = vld [vmem:[%s1127 + $0x1c8] sm:$0xff]
      %v1186 = vld [vmem:[%s1127 + $0x1d0] sm:$0xff]
      %v1187 = vld [vmem:[%s1127 + $0x1d8] sm:$0xff]
      %v1188 = vld [vmem:[%s1127 + $0x1e0] sm:$0xff]
      %v1189 = vld [vmem:[%s1127 + $0x1e8] sm:$0xff]
      %v1190 = vld [vmem:[%s1127 + $0x1f0] sm:$0xff]
      %v1191 = vld [vmem:[%s1127 + $0x1f8] sm:$0xff]
      %1192 = vmatprep.subr.mxu0 %v1159
      %1193 = vmatpush1.msra.mxu0 %v1158
      %1194 = vmatprep.subr.mxu0 %v1157
      %1195 = vmatpush1.msra.mxu0 %v1156
      %1196 = vmatprep.subr.mxu0 %v1155
      %1197 = vmatpush1.msra.mxu0 %v1154
      %1198 = vmatprep.subr.mxu0 %v1153
      %1199 = vmatpush1.msra.mxu0 %v1152
      %1200 = vmatprep.subr.mxu0 %v1151
      %1201 = vmatpush1.msra.mxu0 %v1150
      %1202 = vmatprep.subr.mxu0 %v1149
      %1203 = vmatpush1.msra.mxu0 %v1148
      %1204 = vmatprep.subr.mxu0 %v1147
      %1205 = vmatpush1.msra.mxu0 %v1146
      %1206 = vmatprep.subr.mxu0 %v1145
      %1207 = vmatpush1.msra.mxu0 %v1144
      %1208 = vmatprep.subr.mxu0 %v1143
      %1209 = vmatpush1.msra.mxu0 %v1142
      %1210 = vmatprep.subr.mxu0 %v1141
      %1211 = vmatpush1.msra.mxu0 %v1140
      %1212 = vmatprep.subr.mxu0 %v1139
      %1213 = vmatpush1.msra.mxu0 %v1138
      %1214 = vmatprep.subr.mxu0 %v1137
      %1215 = vmatpush1.msra.mxu0 %v1136
      %1216 = vmatprep.subr.mxu0 %v1135
      %1217 = vmatpush1.msra.mxu0 %v1134
      %1218 = vmatprep.subr.mxu0 %v1133
      %1219 = vmatpush1.msra.mxu0 %v1132
      %1220 = vmatprep.subr.mxu0 %v1131
      %1221 = vmatpush1.msra.mxu0 %v1130
      %1222 = vmatprep.subr.mxu0 %v1129
      %1223 = vmatpush1.msra.mxu0 %v1128
      %1224 = vmatprep.subr.mxu0 %v1191
      %1225 = vmatpush2.msra.mxu0 %v1190
      %1226 = vmatprep.subr.mxu0 %v1189
      %1227 = vmatpush2.msra.mxu0 %v1188
      %1228 = vmatprep.subr.mxu0 %v1187
      %1229 = vmatpush2.msra.mxu0 %v1186
      %1230 = vmatprep.subr.mxu0 %v1185
      %1231 = vmatpush2.msra.mxu0 %v1184
      %1232 = vmatprep.subr.mxu0 %v1183
      %1233 = vmatpush2.msra.mxu0 %v1182
      %1234 = vmatprep.subr.mxu0 %v1181
      %1235 = vmatpush2.msra.mxu0 %v1180
      %1236 = vmatprep.subr.mxu0 %v1179
      %1237 = vmatpush2.msra.mxu0 %v1178
      %1238 = vmatprep.subr.mxu0 %v1177
      %1239 = vmatpush2.msra.mxu0 %v1176
      %1240 = vmatprep.subr.mxu0 %v1175
      %1241 = vmatpush2.msra.mxu0 %v1174
      %1242 = vmatprep.subr.mxu0 %v1173
      %1243 = vmatpush2.msra.mxu0 %v1172
      %1244 = vmatprep.subr.mxu0 %v1171
      %1245 = vmatpush2.msra.mxu0 %v1170
      %1246 = vmatprep.subr.mxu0 %v1169
      %1247 = vmatpush2.msra.mxu0 %v1168
      %1248 = vmatprep.subr.mxu0 %v1167
      %1249 = vmatpush2.msra.mxu0 %v1166
      %1250 = vmatprep.subr.mxu0 %v1165
      %1251 = vmatpush2.msra.mxu0 %v1164
      %1252 = vmatprep.subr.mxu0 %v1163
      %1253 = vmatpush2.msra.mxu0 %v1162
      %1254 = vmatprep.subr.mxu0 %v1161
      %1255 = vmatpush2.msra.mxu0 %v1160
      %1256 = vmatprep.mubr.f32.mxu0 %v837
      %1257 = vmatmul.mubr.f32.gmra.mxu0 %v834
      %v1258 = vpop.f32.mrf.mxu0
      %v1259 = vadd.f32 0.0, %v1258
      %v1260 = vpop.f32.mrf.mxu0
      %v1261 = vadd.f32 0.0, %v1260
      %1262 = vmatprep.mubr.f32.mxu0 %v843
      %1263 = vmatmul.mubr.f32.gmra.mxu0 %v842
      %v1264 = vpop.f32.mrf.mxu0
      %v1265 = vadd.f32 0.0, %v1264
      %v1266 = vpop.f32.mrf.mxu0
      %v1267 = vadd.f32 0.0, %v1266
      %1268 = vdwg.mxu0
      %v1269 = vadd.f32 %v1117, %v1259
      %v1270 = vadd.f32 %v1119, %v1261
      %v1271 = vadd.f32 %v1123, %v1265
      %v1272 = vadd.f32 %v1125, %v1267
      %v1273 = vld [vmem:[%s4] sm:$0x3]
      %v1275 = vlaneseq
      %v1276 = vshrl.u32 %v1275, 7
      %v1277 = vsub.s32 0, %v1276
      %v1278 = vrot.slane %v1273, %v1277
      %v1279 = vlaneseq
      %v1280 = vshrl.u32 %v1279, 7
      %v1281 = vsub.s32 1, %v1280
      %v1282 = vrot.slane %v1273, %v1281
      %v1285 = vadd.f32 %v1269, %v1278
      %v1286 = vadd.f32 %v1270, %v1282
      %v1287 = vadd.f32 %v1271, %v1278
      %v1288 = vadd.f32 %v1272, %v1282
      %v1289 = vadd.f32 %v1285, %v1287
      %v1290 = vrot.slane %v1289, 4
      %v1291 = vadd.f32 %v1289, %v1290
      %v1292 = vrot.slane %v1291, 2
      %v1293 = vadd.f32 %v1291, %v1292
      %v1294 = vrot.slane %v1293, 1
      %v1295 = vadd.f32 %v1293, %v1294
      %v1296 = vadd.f32 %v1286, %v1288
      %v1297 = vrot.slane %v1296, 4
      %v1298 = vadd.f32 %v1296, %v1297
      %v1299 = vrot.slane %v1298, 2
      %v1300 = vadd.f32 %v1298, %v1299
      %v1301 = vrot.slane %v1300, 1
      %v1302 = vadd.f32 %v1300, %v1301
      %v1303 = vld [vmem:[%s5] sm:$0xff]
      %v1306 = vcombine.low %v1295, %v1302
      %v1308 = vmul.f32 %v1303, %v1306
      %v1310 = vcombine.high %v1308, %v1308
      %vm1312 = vcmask 1043456
      %v1313 = vsel %vm1312, %v1308, 0.0
      %v1314 = vsel %vm1312, %v1310, 0.0
      %v1315 = vadd.f32 %v1313, %v1314
      %1316 = vadd.xlane.f32.xlu0 %v1315
      %v1317 = vpop.xlane.xlu0 %1316
      %v1318 = vmul.f32 %v1317, 0.00390625
      %v1319 = vld [vmem:[%s6] sm:$0xf]
      %v1320 = vadd.f32 %v1318, %v1319
      %v1321 = vmax.f32 %v1320, 0.0
      %v1322 = vld [vmem:[%s7] sm:$0xff]
      %1324 = vset.pattern.permute.xlu0 0
      %1325 = vperm.xlu0 %1324, %v1321
      %v1326 = vpop.permute.xlu0 %1325
      %v1328 = vunpack.c.l.s4 839922192
      %v1329 = vunpack.c.0.s8 %v1328
      %v1330 = vlaneseq
      %v1331 = vshrl.u32 %v1330, 7
      %v1332 = vsub.s32 %v1329, %v1331
      %v1333 = vrot.slane %v1326, %v1332
      %v1335 = vmul.f32 %v1322, %v1333
      %v1337 = vcombine.high %v1335, %v1335
      %v1339 = vsel %vm1312, %v1335, 0.0
      %v1340 = vrot.slane %v1339, 4
      %v1341 = vadd.f32 %v1339, %v1340
      %v1342 = vrot.slane %v1341, 2
      %v1343 = vadd.f32 %v1341, %v1342
      %v1344 = vrot.slane %v1343, 1
      %v1345 = vadd.f32 %v1343, %v1344
      %v1346 = vsel %vm1312, %v1337, 0.0
      %v1347 = vrot.slane %v1346, 4
      %v1348 = vadd.f32 %v1346, %v1347
      %v1349 = vrot.slane %v1348, 2
      %v1350 = vadd.f32 %v1348, %v1349
      %v1351 = vrot.slane %v1350, 1
      %v1352 = vadd.f32 %v1350, %v1351
      %v1353 = vld [vmem:[%s8] sm:$0x3]
      %v1355 = vlaneseq
      %v1356 = vshrl.u32 %v1355, 7
      %v1357 = vsub.s32 0, %v1356
      %v1358 = vrot.slane %v1353, %v1357
      %v1359 = vlaneseq
      %v1360 = vshrl.u32 %v1359, 7
      %v1361 = vsub.s32 1, %v1360
      %v1362 = vrot.slane %v1353, %v1361
      %v1365 = vadd.f32 %v1345, %v1358
      %v1366 = vadd.f32 %v1352, %v1362
      %v1367 = vsub.f32 0.0, %v1365
      %v1368 = vsub.f32 0.0, %v1366
      %v1369 = vmul.f32 %v1367, 1.442695
      %v1370 = vpow.pop %v1369
      %v1371 = vmul.f32 %v1368, 1.442695
      %v1372 = vpow.pop %v1371
      %v1373 = vadd.f32 %v1370, 1.0
      %v1374 = vadd.f32 %v1372, 1.0
      %v1375 = vrcp.pop %v1373
      %v1376 = vmul.f32 1.0, %v1375
      %v1377 = vrcp.pop %v1374
      %v1378 = vmul.f32 1.0, %v1377
      %v1379 = vlaneseq
      %v1380 = vshrl.u32 %v1379, 7
      %v1381 = vsub.s32 0, %v1380
      %v1382 = vrot.slane %v1376, %v1381
      %v1383 = vlaneseq
      %v1384 = vshrl.u32 %v1383, 7
      %v1385 = vsub.s32 0, %v1384
      %v1386 = vrot.slane %v1378, %v1385
      %v1387 = vmul.f32 %v1285, %v1382
      %v1388 = vmul.f32 %v1286, %v1386
      %v1389 = vmul.f32 %v1287, %v1382
      %v1390 = vmul.f32 %v1288, %v1386
      %v1391 = vadd.f32 %v1387, %v333
      %v1392 = vadd.f32 %v1388, %v334
      %v1393 = vadd.f32 %v1389, %v335
      %v1394 = vadd.f32 %v1390, %v336
      %1395 = vst [vmem:[%s332] sm:$0xff] %v1391
      %1396 = vst [vmem:[%s332 + $0x8] sm:$0xff] %v1392
      %1397 = vst [vmem:[%s332 + $0x10] sm:$0xff] %v1393
      %1398 = vst [vmem:[%s332 + $0x18] sm:$0xff] %v1394
      %p1399 = scmp.lt.s32.totalorder %s20, 1
      %s1400 = scalar_select %p1399, %s20, 1
      %s1401 = smul.addr %s1400, 4
      %s1402 = smul.addr %s1401, 8
      %s1403 = scalar_lea.vmem %s9, %s1402
      // Predicated region
      $region57: #{rcab_ca_pallas.1} parent=55 // pred_check
        %p1404 = pneg %p232
      $region58: #{rcab_ca_pallas.1} parent=55 // pred_check_branch
        %1406 = sbr.rel (%p1404) target = $region60
      $region59: #{rcab_ca_pallas.1} parent=55 // pred_region
        _
      $region60: #{rcab_ca_pallas.1} parent=55 // pred_fallthru
        _
    $region56: #{rcab_ca_pallas.1} parent=5 // pred_fallthru
      _
    %p1407 = scmp.le.s32.totalorder 2, %s15
    // Predicated region
    $region61: #{rcab_ca_pallas.1} parent=5 // pred_check
      %p1408 = pneg %p1407
    $region62: #{rcab_ca_pallas.1} parent=5 // pred_check_branch
      %1410 = sbr.rel (%p1408) target = $region64
    $region63: #{rcab_ca_pallas.1} parent=5 // pred_region
      %s1411 = ssub.s32 %s15, 2
      // Predicated region
      $region65: #{rcab_ca_pallas.1} parent=63 // pred_check
        %p1412 = pneg %p238
      $region66: #{rcab_ca_pallas.1} parent=63 // pred_check_branch
        %1414 = sbr.rel (%p1412) target = $region68
      $region67: #{rcab_ca_pallas.1} parent=63 // pred_region
        %p1415 = scmp.lt.s32.totalorder %s21, 1
        %s1416 = scalar_select %p1415, %s21, 1
        %s1417 = smul.addr %s1416, 4
        %s1418 = smul.addr %s1417, 8
        %s1419 = scalar_lea.vmem %s9, %s1418
      $region68: #{rcab_ca_pallas.1} parent=63 // pred_fallthru
        _
    $region64: #{rcab_ca_pallas.1} parent=5 // pred_fallthru
      _
  $region6: #{rcab_ca_pallas.1} parent=0 // loop_footer
    %s19 = sadd.s32 1, %s15
  $region7: #{rcab_ca_pallas.1} parent=0 // loop_footer_branch
    %14 = sbr.rel target = $region3
  $region8: #{rcab_ca_pallas.1} parent=0 // loop_exit
    _

</llo_original>
